<compile_context>
chip_gen: v7x
topology: tpu7x:2x2x1
jax: 0.10.0
libtpu: 0.0.40
codegen_flags: <defaults>
</compile_context>

<pallas_src>
import functools

import jax
import jax.numpy as jnp
from jax import lax
from jax.experimental import pallas as pl
from jax.experimental.pallas import tpu as pltpu


def convlstm_kernel(xh_ref, w_ref, c_prev_ref, h_out_ref, c_out_ref,
                    *, H, W, Cin_tot, Ch, K, Kc, Kc_pad):
    """One batch element per grid step.  All refs are VMEM blocks.

    xh_ref:     (H+2p, W+2p, Cin_tot)  zero-padded concat([x, h_prev]) in NHWC
    w_ref:      (4*Ch, Kc_pad)         rows = out channel, cols = (kw, kh, cin)
                                       taps followed by a bias column + zeros
    c_prev_ref: (Ch, H*W)              flattened NCHW
    h_out_ref:  (Ch, H*W)
    c_out_ref:  (Ch, H*W)
    """
    xh = xh_ref[...]
    HW = H * W

    # ---- im2col patch matrix: (H*W, Kc_pad) ---------------------------------
    # Rows = output pixels (h, w); columns = (kw, kh, cin) taps, then constant
    # ones (the first ones-column multiplies the bias row of w_ref).
    # The W-shift (sublane shift) is done once per kw; the kh slice only
    # touches the untiled leading dim and the reshape keeps the lane dim.
    taps = []
    for kw in range(K):
        xh_w = xh[:, kw:kw + W, :]                      # (H+2p, W, Cin_tot)
        for kh in range(K):
            taps.append(xh_w[kh:kh + H].reshape(HW, Cin_tot))
    taps.append(jnp.ones((HW, Kc_pad - Kc), dtype=xh.dtype))
    patch = jnp.concatenate(taps, axis=-1)              # (H*W, Kc_pad)

    # ---- single MXU contraction, f32 accumulation ---------------------------
    # (4*Ch, Kc_pad) x (H*W, Kc_pad)^T -> (4*Ch, H*W): output lanes = H*W
    # (dense), gate channels sit on 8-aligned sublanes.  Bias already folded in.
    acc = lax.dot_general(
        w_ref[...], patch,
        dimension_numbers=(((1,), (1,)), ((), ())),
        preferred_element_type=jnp.float32)             # (4*Ch, H*W)

    # Gate order matches torch.split(conv_output, hidden, dim=1): i, f, o, g.
    sig = jax.nn.sigmoid(acc[:3 * Ch, :])               # i, f, o in one EUP pass
    g = jnp.tanh(acc[3 * Ch:, :])

    i_g = sig[0 * Ch:1 * Ch, :]
    f_g = sig[1 * Ch:2 * Ch, :]
    o_g = sig[2 * Ch:3 * Ch, :]

    c_prev = c_prev_ref[...].astype(jnp.float32)
    c_new = f_g * c_prev + i_g * g
    h_new = o_g * jnp.tanh(c_new)

    c_out_ref[...] = c_new.astype(c_out_ref.dtype)
    h_out_ref[...] = h_new.astype(h_out_ref.dtype)


def conv_lstm_cell(x_nchw, h_prev_nchw, c_prev_nchw, weight_oihw, bias,
                   *, kernel_size):
    """Forward pass of ConvLSTMCell.  Inputs/outputs are NCHW like PyTorch."""
    N, Cin, H, W = x_nchw.shape
    Ch = h_prev_nchw.shape[1]
    K = kernel_size
    p = K // 2
    Cin_tot = Cin + Ch
    Kc = K * K * Cin_tot
    Kc_pad = ((Kc + 1 + 127) // 128) * 128     # bias column + pad to 128 lanes
    HW = H * W
    out_dtype = jnp.promote_types(x_nchw.dtype, c_prev_nchw.dtype)

    # ---- glue (small, runs fused under jit) ---------------------------------
    # Conv input in NHWC, spatially zero-padded ("same" padding of nn.Conv2d).
    xh = jnp.concatenate([x_nchw, h_prev_nchw], axis=1)          # (N,Cin_tot,H,W)
    xh = jnp.transpose(xh, (0, 2, 3, 1))                          # NHWC
    xh_pad = jnp.pad(xh, ((0, 0), (p, p), (p, p), (0, 0)))

    # c_prev and both outputs stay in (flattened) NCHW: reshapes only.
    c_prev_flat = c_prev_nchw.reshape(N, Ch, HW)

    # Weight rows = out channel, cols = (kw, kh, cin) matching the in-kernel
    # tap order, plus a bias column; contraction dim padded to 128 (MXU-shaped).
    w_mat = jnp.transpose(weight_oihw, (0, 3, 2, 1)).reshape(4 * Ch, Kc)
    w_full = jnp.zeros((4 * Ch, Kc_pad), jnp.float32)
    w_full = w_full.at[:, :Kc].set(w_mat.astype(jnp.float32))
    w_full = w_full.at[:, Kc].set(bias.astype(jnp.float32))

    kernel = functools.partial(
        convlstm_kernel, H=H, W=W, Cin_tot=Cin_tot, Ch=Ch, K=K,
        Kc=Kc, Kc_pad=Kc_pad)

    h_flat, c_flat = pl.pallas_call(
        kernel,
        out_shape=(jax.ShapeDtypeStruct((N, Ch, HW), out_dtype),
                   jax.ShapeDtypeStruct((N, Ch, HW), out_dtype)),
        grid=(N,),
        in_specs=[
            pl.BlockSpec((None, H + 2 * p, W + 2 * p, Cin_tot),
                         lambda n: (n, 0, 0, 0)),
            pl.BlockSpec((4 * Ch, Kc_pad), lambda n: (0, 0)),   # resident weights
            pl.BlockSpec((None, Ch, HW), lambda n: (n, 0, 0)),
        ],
        out_specs=(
            pl.BlockSpec((None, Ch, HW), lambda n: (n, 0, 0)),
            pl.BlockSpec((None, Ch, HW), lambda n: (n, 0, 0)),
        ),
        compiler_params=pltpu.CompilerParams(
            dimension_semantics=("parallel",),
            vmem_limit_bytes=32 * 1024 * 1024),
    )(xh_pad, w_full, c_prev_flat)

    # Free reshapes back to PyTorch's NCHW convention (no transposes).
    return (h_flat.reshape(N, Ch, H, W), c_flat.reshape(N, Ch, H, W))


def _reference_conv_lstm_cell(x, h0, c0, weight, bias, K):
    """Pure-JAX NCHW reference replicating the PyTorch module exactly."""
    combined = jnp.concatenate([x, h0], axis=1)
    conv_out = lax.conv_general_dilated(
        combined, weight, window_strides=(1, 1),
        padding=[(K // 2, K // 2), (K // 2, K // 2)],
        dimension_numbers=("NCHW", "OIHW", "NCHW"))
    conv_out = conv_out + bias[None, :, None, None]
    cc_i, cc_f, cc_o, cc_g = jnp.split(conv_out, 4, axis=1)
    i = jax.nn.sigmoid(cc_i)
    f = jax.nn.sigmoid(cc_f)
    o = jax.nn.sigmoid(cc_o)
    g = jnp.tanh(cc_g)
    c_cur = f * c0 + i * g
    h_cur = o * jnp.tanh(c_cur)
    return h_cur, c_cur


if __name__ == "__main__":
    # Small shapes consistent with the module's forward.
    N, Cin, Ch, H, W, K = 2, 4, 8, 16, 16, 3

    key = jax.random.PRNGKey(0)
    k1, k2, k3, k4, k5 = jax.random.split(key, 5)
    x = jax.random.normal(k1, (N, Cin, H, W), jnp.float32)       # input_tensor
    h0 = jax.random.normal(k2, (N, Ch, H, W), jnp.float32)       # h_prev
    c0 = jax.random.normal(k3, (N, Ch, H, W), jnp.float32)       # c_prev

    # Deterministic synthetic parameters (nn.Conv2d(Cin+Ch, 4*Ch, K) shapes).
    weight = 0.1 * jax.random.normal(k4, (4 * Ch, Cin + Ch, K, K), jnp.float32)
    bias = 0.1 * jax.random.normal(k5, (4 * Ch,), jnp.float32)

    fwd = jax.jit(conv_lstm_cell, static_argnames=("kernel_size",))
    h_new, c_new = fwd(x, h0, c0, weight, bias, kernel_size=K)
    jax.block_until_ready((h_new, c_new))

    h_ref, c_ref = _reference_conv_lstm_cell(x, h0, c0, weight, bias, K)
    assert h_new.shape == (N, Ch, H, W) and c_new.shape == (N, Ch, H, W)
    assert jnp.allclose(h_new, h_ref, atol=1e-4, rtol=1e-4)
    assert jnp.allclose(c_new, c_ref, atol=1e-4, rtol=1e-4)

    print("KERNEL_OK")
</pallas_src>

<mosaic_0001>
module attributes {stable_mosaic.version = 11 : i64} {
  func.func @convlstm_kernel(%arg0: i32, %arg1: memref<1x18x18x12xf32, #tpu.memory_space<vmem>>, %arg2: memref<32x128xf32, #tpu.memory_space<vmem>>, %arg3: memref<1x8x256xf32, #tpu.memory_space<vmem>>, %arg4: memref<1x8x256xf32, #tpu.memory_space<vmem>>, %arg5: memref<1x8x256xf32, #tpu.memory_space<vmem>>) attributes {dimension_semantics = [#tpu.dimension_semantics<parallel>], iteration_bounds = array<i64: 2>, scalar_prefetch = 0 : i64, scratch_operands = 0 : i64, tpu.core_type = #tpu.core_type<tc>, window_params = [{transform_indices = @transform_0, window_bounds = array<i64: 1, 18, 18, 12>}, {pipeline_mode = #tpu.pipeline_mode<synchronous>, transform_indices = @transform_1, window_bounds = array<i64: 32, 128>}, {transform_indices = @transform_2, window_bounds = array<i64: 1, 8, 256>}, {transform_indices = @transform_3, window_bounds = array<i64: 1, 8, 256>}, {transform_indices = @transform_4, window_bounds = array<i64: 1, 8, 256>}]} {
    %c0 = arith.constant 0 : index
    %c0_0 = arith.constant 0 : index
    %c0_1 = arith.constant 0 : index
    %c0_2 = arith.constant 0 : index
    %0 = vector.load %arg1[%c0, %c0_0, %c0_1, %c0_2] : memref<1x18x18x12xf32, #tpu.memory_space<vmem>>, vector<1x18x18x12xf32>
    %1 = vector.shape_cast %0 : vector<1x18x18x12xf32> to vector<18x18x12xf32>
    %2 = vector.extract_strided_slice %1 {offsets = [0, 0, 0], sizes = [18, 16, 12], strides = [1, 1, 1]} : vector<18x18x12xf32> to vector<18x16x12xf32>
    %3 = vector.extract_strided_slice %2 {offsets = [0, 0, 0], sizes = [16, 16, 12], strides = [1, 1, 1]} : vector<18x16x12xf32> to vector<16x16x12xf32>
    %4 = vector.shape_cast %3 : vector<16x16x12xf32> to vector<256x12xf32>
    %5 = vector.extract_strided_slice %2 {offsets = [1, 0, 0], sizes = [16, 16, 12], strides = [1, 1, 1]} : vector<18x16x12xf32> to vector<16x16x12xf32>
    %6 = vector.shape_cast %5 : vector<16x16x12xf32> to vector<256x12xf32>
    %7 = vector.extract_strided_slice %2 {offsets = [2, 0, 0], sizes = [16, 16, 12], strides = [1, 1, 1]} : vector<18x16x12xf32> to vector<16x16x12xf32>
    %8 = vector.shape_cast %7 : vector<16x16x12xf32> to vector<256x12xf32>
    %9 = vector.extract_strided_slice %1 {offsets = [0, 1, 0], sizes = [18, 16, 12], strides = [1, 1, 1]} : vector<18x18x12xf32> to vector<18x16x12xf32>
    %10 = vector.extract_strided_slice %9 {offsets = [0, 0, 0], sizes = [16, 16, 12], strides = [1, 1, 1]} : vector<18x16x12xf32> to vector<16x16x12xf32>
    %11 = vector.shape_cast %10 : vector<16x16x12xf32> to vector<256x12xf32>
    %12 = vector.extract_strided_slice %9 {offsets = [1, 0, 0], sizes = [16, 16, 12], strides = [1, 1, 1]} : vector<18x16x12xf32> to vector<16x16x12xf32>
    %13 = vector.shape_cast %12 : vector<16x16x12xf32> to vector<256x12xf32>
    %14 = vector.extract_strided_slice %9 {offsets = [2, 0, 0], sizes = [16, 16, 12], strides = [1, 1, 1]} : vector<18x16x12xf32> to vector<16x16x12xf32>
    %15 = vector.shape_cast %14 : vector<16x16x12xf32> to vector<256x12xf32>
    %16 = vector.extract_strided_slice %1 {offsets = [0, 2, 0], sizes = [18, 16, 12], strides = [1, 1, 1]} : vector<18x18x12xf32> to vector<18x16x12xf32>
    %17 = vector.extract_strided_slice %16 {offsets = [0, 0, 0], sizes = [16, 16, 12], strides = [1, 1, 1]} : vector<18x16x12xf32> to vector<16x16x12xf32>
    %18 = vector.shape_cast %17 : vector<16x16x12xf32> to vector<256x12xf32>
    %19 = vector.extract_strided_slice %16 {offsets = [1, 0, 0], sizes = [16, 16, 12], strides = [1, 1, 1]} : vector<18x16x12xf32> to vector<16x16x12xf32>
    %20 = vector.shape_cast %19 : vector<16x16x12xf32> to vector<256x12xf32>
    %21 = vector.extract_strided_slice %16 {offsets = [2, 0, 0], sizes = [16, 16, 12], strides = [1, 1, 1]} : vector<18x16x12xf32> to vector<16x16x12xf32>
    %22 = vector.shape_cast %21 : vector<16x16x12xf32> to vector<256x12xf32>
    %cst = arith.constant 1.000000e+00 : f32
    %23 = vector.broadcast %cst : f32 to vector<256x20xf32>
    %24 = tpu.concatenate %4, %6, %8, %11, %13, %15, %18, %20, %22, %23 in 1 : vector<256x12xf32>, vector<256x12xf32>, vector<256x12xf32>, vector<256x12xf32>, vector<256x12xf32>, vector<256x12xf32>, vector<256x12xf32>, vector<256x12xf32>, vector<256x12xf32>, vector<256x20xf32> -> vector<256x128xf32>
    %c0_3 = arith.constant 0 : index
    %c0_4 = arith.constant 0 : index
    %25 = vector.load %arg2[%c0_3, %c0_4] : memref<32x128xf32, #tpu.memory_space<vmem>>, vector<32x128xf32>
    %cst_5 = arith.constant dense<0.000000e+00> : vector<32x256xf32>
    %26 = tpu.matmul %25, %24, %cst_5 {dimension_numbers = #tpu.dot_dimension_numbers<[1], [1], [0], [0], [0, 0, 1, 0], [], []>} : vector<32x128xf32>, vector<256x128xf32>, vector<32x256xf32> -> vector<32x256xf32>
    %27 = vector.extract_strided_slice %26 {offsets = [0, 0], sizes = [24, 256], strides = [1, 1]} : vector<32x256xf32> to vector<24x256xf32>
    %28 = arith.negf %27 : vector<24x256xf32>
    %29 = math.exp %28 : vector<24x256xf32>
    %cst_6 = arith.constant 1.000000e+00 : f32
    %30 = vector.broadcast %cst_6 : f32 to vector<24x256xf32>
    %31 = arith.addf %30, %29 : vector<24x256xf32>
    %32 = arith.divf %30, %31 : vector<24x256xf32>
    %33 = vector.extract_strided_slice %26 {offsets = [24, 0], sizes = [8, 256], strides = [1, 1]} : vector<32x256xf32> to vector<8x256xf32>
    %34 = math.tanh %33 : vector<8x256xf32>
    %35 = vector.extract_strided_slice %32 {offsets = [0, 0], sizes = [8, 256], strides = [1, 1]} : vector<24x256xf32> to vector<8x256xf32>
    %36 = vector.extract_strided_slice %32 {offsets = [8, 0], sizes = [8, 256], strides = [1, 1]} : vector<24x256xf32> to vector<8x256xf32>
    %37 = vector.extract_strided_slice %32 {offsets = [16, 0], sizes = [8, 256], strides = [1, 1]} : vector<24x256xf32> to vector<8x256xf32>
    %c0_7 = arith.constant 0 : index
    %c0_8 = arith.constant 0 : index
    %c0_9 = arith.constant 0 : index
    %38 = vector.load %arg3[%c0_7, %c0_8, %c0_9] : memref<1x8x256xf32, #tpu.memory_space<vmem>>, vector<1x8x256xf32>
    %39 = vector.shape_cast %38 : vector<1x8x256xf32> to vector<8x256xf32>
    %40 = arith.mulf %36, %39 : vector<8x256xf32>
    %41 = arith.mulf %35, %34 : vector<8x256xf32>
    %42 = arith.addf %40, %41 : vector<8x256xf32>
    %43 = math.tanh %42 : vector<8x256xf32>
    %44 = arith.mulf %37, %43 : vector<8x256xf32>
    %c0_10 = arith.constant 0 : index
    %c0_11 = arith.constant 0 : index
    %c0_12 = arith.constant 0 : index
    %45 = vector.load %arg5[%c0_10, %c0_11, %c0_12] : memref<1x8x256xf32, #tpu.memory_space<vmem>>, vector<1x8x256xf32>
    %46 = vector.shape_cast %45 : vector<1x8x256xf32> to vector<8x256xf32>
    %47 = vector.shape_cast %42 : vector<8x256xf32> to vector<1x8x256xf32>
    tpu.vector_store %arg5[%c0_10, %c0_11, %c0_12], %47 {strides = array<i32>} : memref<1x8x256xf32, #tpu.memory_space<vmem>>, vector<1x8x256xf32>,
    %c0_13 = arith.constant 0 : index
    %c0_14 = arith.constant 0 : index
    %c0_15 = arith.constant 0 : index
    %48 = vector.load %arg4[%c0_13, %c0_14, %c0_15] : memref<1x8x256xf32, #tpu.memory_space<vmem>>, vector<1x8x256xf32>
    %49 = vector.shape_cast %48 : vector<1x8x256xf32> to vector<8x256xf32>
    %50 = vector.shape_cast %44 : vector<8x256xf32> to vector<1x8x256xf32>
    tpu.vector_store %arg4[%c0_13, %c0_14, %c0_15], %50 {strides = array<i32>} : memref<1x8x256xf32, #tpu.memory_space<vmem>>, vector<1x8x256xf32>,
    return
  }
  func.func @transform_0(%arg0: i32) -> (i32, i32, i32, i32) {
    %c0_i32 = arith.constant 0 : i32
    %c0_i32_0 = arith.constant 0 : i32
    %c0_i32_1 = arith.constant 0 : i32
    %c0_i32_2 = arith.constant 0 : i32
    return %arg0, %c0_i32, %c0_i32_0, %c0_i32_1 : i32, i32, i32, i32
  }
  func.func @transform_1(%arg0: i32) -> (i32, i32) {
    %c0_i32 = arith.constant 0 : i32
    %c0_i32_0 = arith.constant 0 : i32
    %c0_i32_1 = arith.constant 0 : i32
    return %c0_i32, %c0_i32_0 : i32, i32
  }
  func.func @transform_2(%arg0: i32) -> (i32, i32, i32) {
    %c0_i32 = arith.constant 0 : i32
    %c0_i32_0 = arith.constant 0 : i32
    %c0_i32_1 = arith.constant 0 : i32
    return %arg0, %c0_i32, %c0_i32_0 : i32, i32, i32
  }
  func.func @transform_3(%arg0: i32) -> (i32, i32, i32) {
    %c0_i32 = arith.constant 0 : i32
    %c0_i32_0 = arith.constant 0 : i32
    %c0_i32_1 = arith.constant 0 : i32
    return %arg0, %c0_i32, %c0_i32_0 : i32, i32, i32
  }
  func.func @transform_4(%arg0: i32) -> (i32, i32, i32) {
    %c0_i32 = arith.constant 0 : i32
    %c0_i32_0 = arith.constant 0 : i32
    %c0_i32_1 = arith.constant 0 : i32
    return %arg0, %c0_i32, %c0_i32_0 : i32, i32, i32
  }
}

</mosaic_0001>

<llo_original>
// kernel: conv_lstm_cell.1
$region0: #{conv_lstm_cell.1}
  #allocation0 [shape = 'u32[]', space=smem, size = 0x4, offset = 0x4, fixed_abs, tag = 'smem constant byte address 0x4 - core index']
  #allocation1 [shape = 'u32[144,128]{1,0:T(1,128)}', space=vmem, size = 0x12000, scoped, tag = 'internal scratch']
  %s0 = inlined_call_operand.vmem [shape: f32[2,18,18,12], index: 0, kind: input, shape index: {}]
  %s1 = inlined_call_operand.vmem [shape: f32[32,128], index: 1, kind: input, shape index: {}]
  %s2 = inlined_call_operand.vmem [shape: f32[2,8,256], index: 2, kind: input, shape index: {}]
  %s3 = inlined_call_operand.vmem [shape: f32[2,8,256], index: 3, kind: output, shape index: {0}]
  %s4 = inlined_call_operand.vmem [shape: f32[2,8,256], index: 4, kind: output, shape index: {1}]
  %5 = xla_tuple %s3, %s4
  %s6 = sld [smem:[#allocation0]]
  $region53: #{conv_lstm_cell.1} parent=0
    _
  %s8 = ssub.s32 1, %s6
  %s9 = scalar_select 0, %s8, %s6
  loop: start=0, step=1, limit=4
  $region2: #{conv_lstm_cell.1} parent=0 // loop_pre_header
    _
  $region3: #{conv_lstm_cell.1} parent=0 // loop_header
    %s11 = sphi 0, %s15
    %p12 = scmp.ge.s32.totalorder %s11, 4
    %s21 = sphi 0, %s23
    %s24 = sphi 0, %s21
    %s25 = sphi 0, %s24
    %s41 = sphi 0, %s25
    %s45 = sphi 0, %s45
    %s47 = sphi 0, %s45
    %s48 = sphi 0, %s47
    %s62 = sphi 0, %s48
    %s68 = sphi 0, %s70
    %s71 = sphi 0, %s68
    %s72 = sphi 0, %s71
    %s88 = sphi 0, %s72
    %s94 = sphi 0, %s96
    %s97 = sphi 0, %s94
    %s98 = sphi 0, %s97
    %s114 = sphi 0, %s98
    %s120 = sphi 0, %s122
    %s123 = sphi 0, %s120
    %s124 = sphi 0, %s123
    %s140 = sphi 0, %s124
  $region4: #{conv_lstm_cell.1} parent=0 // loop_header_branch
    %14 = sbr.rel (%p12) target = $region8
  $region5: #{conv_lstm_cell.1} parent=0 // loop_body
    %s16 = ssub.s32 %s11, 1
    %s17 = ssub.s32 %s11, 2
    %s18 = sadd.s32 %s11, 1
    %s19 = ssub.s32 %s11, %s18
    %p20 = scmp.eq.s32.totalorder %s19, 0
    %s22 = sadd.s32 %s21, 1
    %s23 = scalar_select %p20, %s21, %s22
    %p26 = pneg %p20
    %p27 = scmp.eq.s32.totalorder %s11, 1
    %p28 = por %p26, %p27
    %p29 = scmp.ne.s32.totalorder %s21, %s24
    %p30 = scmp.eq.s32.totalorder %s11, 0
    %p31 = por %p29, %p30
    %p32 = scmp.ne.s32.totalorder %s21, %s24
    %p33 = scmp.eq.s32.totalorder %s16, 1
    %p34 = por %p32, %p33
    %p35 = scmp.ne.s32.totalorder %s24, %s25
    %p36 = scmp.eq.s32.totalorder %s16, 0
    %p37 = por %p35, %p36
    %p38 = scmp.ne.s32.totalorder %s24, %s25
    %p39 = scmp.eq.s32.totalorder %s17, 1
    %p40 = por %p38, %p39
    %p42 = scmp.ne.s32.totalorder %s25, %s41
    %p43 = scmp.eq.s32.totalorder %s17, 0
    %p44 = por %p42, %p43
    %s46 = sadd.s32 %s45, 1
    %p49 = scmp.eq.s32.totalorder %s11, 1
    %p50 = scmp.ne.s32.totalorder %s45, %s47
    %p51 = scmp.eq.s32.totalorder %s11, 0
    %p52 = por %p50, %p51
    %p53 = scmp.ne.s32.totalorder %s45, %s47
    %p54 = scmp.eq.s32.totalorder %s16, 1
    %p55 = por %p53, %p54
    %p56 = scmp.ne.s32.totalorder %s47, %s48
    %p57 = scmp.eq.s32.totalorder %s16, 0
    %p58 = por %p56, %p57
    %p59 = scmp.ne.s32.totalorder %s47, %s48
    %p60 = scmp.eq.s32.totalorder %s17, 1
    %p61 = por %p59, %p60
    %p63 = scmp.ne.s32.totalorder %s48, %s62
    %p64 = scmp.eq.s32.totalorder %s17, 0
    %p65 = por %p63, %p64
    %s66 = ssub.s32 %s11, %s18
    %p67 = scmp.eq.s32.totalorder %s66, 0
    %s69 = sadd.s32 %s68, 1
    %s70 = scalar_select %p67, %s68, %s69
    %p73 = pneg %p67
    %p74 = scmp.eq.s32.totalorder %s11, 1
    %p75 = por %p73, %p74
    %p76 = scmp.ne.s32.totalorder %s68, %s71
    %p77 = scmp.eq.s32.totalorder %s11, 0
    %p78 = por %p76, %p77
    %p79 = scmp.ne.s32.totalorder %s68, %s71
    %p80 = scmp.eq.s32.totalorder %s16, 1
    %p81 = por %p79, %p80
    %p82 = scmp.ne.s32.totalorder %s71, %s72
    %p83 = scmp.eq.s32.totalorder %s16, 0
    %p84 = por %p82, %p83
    %p85 = scmp.ne.s32.totalorder %s71, %s72
    %p86 = scmp.eq.s32.totalorder %s17, 1
    %p87 = por %p85, %p86
    %p89 = scmp.ne.s32.totalorder %s72, %s88
    %p90 = scmp.eq.s32.totalorder %s17, 0
    %p91 = por %p89, %p90
    %s92 = ssub.s32 %s11, %s18
    %p93 = scmp.eq.s32.totalorder %s92, 0
    %s95 = sadd.s32 %s94, 1
    %s96 = scalar_select %p93, %s94, %s95
    %p99 = pneg %p93
    %p100 = scmp.eq.s32.totalorder %s11, 1
    %p101 = por %p99, %p100
    %p102 = scmp.ne.s32.totalorder %s94, %s97
    %p103 = scmp.eq.s32.totalorder %s11, 0
    %p104 = por %p102, %p103
    %p105 = scmp.ne.s32.totalorder %s94, %s97
    %p106 = scmp.eq.s32.totalorder %s16, 1
    %p107 = por %p105, %p106
    %p108 = scmp.ne.s32.totalorder %s97, %s98
    %p109 = scmp.eq.s32.totalorder %s16, 0
    %p110 = por %p108, %p109
    %p111 = scmp.ne.s32.totalorder %s97, %s98
    %p112 = scmp.eq.s32.totalorder %s17, 1
    %p113 = por %p111, %p112
    %p115 = scmp.ne.s32.totalorder %s98, %s114
    %p116 = scmp.eq.s32.totalorder %s17, 0
    %p117 = por %p115, %p116
    %s118 = ssub.s32 %s11, %s18
    %p119 = scmp.eq.s32.totalorder %s118, 0
    %s121 = sadd.s32 %s120, 1
    %s122 = scalar_select %p119, %s120, %s121
    %p125 = pneg %p119
    %p126 = scmp.eq.s32.totalorder %s11, 1
    %p127 = por %p125, %p126
    %p128 = scmp.ne.s32.totalorder %s120, %s123
    %p129 = scmp.eq.s32.totalorder %s11, 0
    %p130 = por %p128, %p129
    %p131 = scmp.ne.s32.totalorder %s120, %s123
    %p132 = scmp.eq.s32.totalorder %s16, 1
    %p133 = por %p131, %p132
    %p134 = scmp.ne.s32.totalorder %s123, %s124
    %p135 = scmp.eq.s32.totalorder %s16, 0
    %p136 = por %p134, %p135
    %p137 = scmp.ne.s32.totalorder %s123, %s124
    %p138 = scmp.eq.s32.totalorder %s17, 1
    %p139 = por %p137, %p138
    %p141 = scmp.ne.s32.totalorder %s124, %s140
    %p142 = scmp.eq.s32.totalorder %s17, 0
    %p143 = por %p141, %p142
    %p144 = scmp.le.s32.totalorder 1, %s11
    %p145 = scmp.lt.s32.totalorder %s11, 3
    %p146 = pnand %p144, %p145
    %p147 = pneg %p146
    // Predicated region
    $region9: #{conv_lstm_cell.1} parent=5 // pred_check
      _
    $region10: #{conv_lstm_cell.1} parent=5 // pred_check_branch
      %149 = sbr.rel (%p146) target = $region12
    $region11: #{conv_lstm_cell.1} parent=5 // pred_region
      %s150 = ssub.s32 %s11, 1
      // Predicated region
      $region13: #{conv_lstm_cell.1} parent=11 // pred_check
        %p151 = pneg %p58
      $region14: #{conv_lstm_cell.1} parent=11 // pred_check_branch
        %153 = sbr.rel (%p151) target = $region16
      $region15: #{conv_lstm_cell.1} parent=11 // pred_region
        _
      $region16: #{conv_lstm_cell.1} parent=11 // pred_fallthru
        _
    $region12: #{conv_lstm_cell.1} parent=5 // pred_fallthru
      _
    %p154 = scmp.lt.s32.totalorder %s11, 2
    // Predicated region
    $region17: #{conv_lstm_cell.1} parent=5 // pred_check
      %p155 = pneg %p154
    $region18: #{conv_lstm_cell.1} parent=5 // pred_check_branch
      %157 = sbr.rel (%p155) target = $region20
    $region19: #{conv_lstm_cell.1} parent=5 // pred_region
      // Predicated region
      $region21: #{conv_lstm_cell.1} parent=19 // pred_check
        %p158 = pneg %p31
      $region22: #{conv_lstm_cell.1} parent=19 // pred_check_branch
        %160 = sbr.rel (%p158) target = $region24
      $region23: #{conv_lstm_cell.1} parent=19 // pred_region
        %p161 = scmp.lt.s32.totalorder %s11, 1
        %s162 = scalar_select %p161, %s11, 1
        %s163 = smul.addr %s162, 54
        %s164 = smul.addr %s163, 8
        %s165 = scalar_lea.vmem %s0, %s164
      $region24: #{conv_lstm_cell.1} parent=19 // pred_fallthru
        _
      // Predicated region
      $region25: #{conv_lstm_cell.1} parent=19 // pred_check
        %p166 = pneg %p78
      $region26: #{conv_lstm_cell.1} parent=19 // pred_check_branch
        %168 = sbr.rel (%p166) target = $region28
      $region27: #{conv_lstm_cell.1} parent=19 // pred_region
        %p169 = scmp.lt.s32.totalorder %s11, 1
        %s170 = scalar_select %p169, %s11, 1
        %s171 = smul.addr %s170, 2
        %s172 = smul.addr %s171, 8
        %s173 = scalar_lea.vmem %s2, %s172
      $region28: #{conv_lstm_cell.1} parent=19 // pred_fallthru
        _
    $region20: #{conv_lstm_cell.1} parent=5 // pred_fallthru
      _
    %p174 = scmp.le.s32.totalorder 1, %s11
    %p175 = scmp.lt.s32.totalorder %s11, 3
    %p176 = pnand %p174, %p175
    %p177 = pneg %p176
    // Predicated region
    $region29: #{conv_lstm_cell.1} parent=5 // pred_check
      _
    $region30: #{conv_lstm_cell.1} parent=5 // pred_check_branch
      %179 = sbr.rel (%p176) target = $region32
    $region31: #{conv_lstm_cell.1} parent=5 // pred_region
      %s180 = ssub.s32 %s11, 1
      %p181 = scmp.lt.s32.totalorder %s16, 1
      %s182 = scalar_select %p181, %s16, 1
      %s183 = smul.addr %s182, 54
      %s184 = smul.addr %s183, 8
      %s185 = scalar_lea.vmem %s0, %s184
      %p186 = pneg %p37
      %p187 = pneg %p34
      %p188 = pneg %p58
      %p189 = pneg %p55
      %p190 = scmp.lt.s32.totalorder %s16, 1
      %s191 = scalar_select %p190, %s16, 1
      %s192 = smul.addr %s191, 2
      %s193 = smul.addr %s192, 8
      %s194 = scalar_lea.vmem %s2, %s193
      %p195 = pneg %p84
      %p196 = pneg %p81
      %p197 = pneg %p110
      %p198 = pneg %p107
      %p199 = scmp.lt.s32.totalorder %s16, 1
      %s200 = scalar_select %p199, %s16, 1
      %s201 = smul.addr %s200, 2
      %s202 = smul.addr %s201, 8
      %s203 = scalar_lea.vmem %s3, %s202
      %p204 = pneg %p136
      %p205 = pneg %p133
      %p206 = scmp.lt.s32.totalorder %s16, 1
      %s207 = scalar_select %p206, %s16, 1
      %s208 = smul.addr %s207, 2
      %s209 = smul.addr %s208, 8
      %s210 = scalar_lea.vmem %s4, %s209
      %p211 = scmp.lt.s32.totalorder %s16, 1
      %s212 = scalar_select %p211, %s16, 1
      %s213 = smul.addr %s212, 54
      %s214 = smul.addr %s213, 8
      %s215 = scalar_lea.vmem %s0, %s214
      %p216 = scmp.lt.s32.totalorder %s16, 1
      %s217 = scalar_select %p216, %s16, 1
      %s218 = smul.addr %s217, 2
      %s219 = smul.addr %s218, 8
      %s220 = scalar_lea.vmem %s2, %s219
      %p221 = scmp.lt.s32.totalorder %s16, 1
      %s222 = scalar_select %p221, %s16, 1
      %s223 = smul.addr %s222, 2
      %s224 = smul.addr %s223, 8
      %s225 = scalar_lea.vmem %s3, %s224
      %p226 = scmp.lt.s32.totalorder %s16, 1
      %s227 = scalar_select %p226, %s16, 1
      %s228 = smul.addr %s227, 2
      %s229 = smul.addr %s228, 8
      %s230 = scalar_lea.vmem %s4, %s229
      %v231 = vld [vmem:[%s215] sm:$0xff]
      %v232 = vld [vmem:[%s215 + $0x8] sm:$0xff]
      %v233 = vld [vmem:[%s215 + $0x10] sm:$0x3]
      %v234 = vld [vmem:[%s215 + $0x18] sm:$0xff]
      %v235 = vld [vmem:[%s215 + $0x20] sm:$0xff]
      %v236 = vld [vmem:[%s215 + $0x28] sm:$0x3]
      %v237 = vld [vmem:[%s215 + $0x30] sm:$0xff]
      %v238 = vld [vmem:[%s215 + $0x38] sm:$0xff]
      %v239 = vld [vmem:[%s215 + $0x40] sm:$0x3]
      %v240 = vld [vmem:[%s215 + $0x48] sm:$0xff]
      %v241 = vld [vmem:[%s215 + $0x50] sm:$0xff]
      %v242 = vld [vmem:[%s215 + $0x58] sm:$0x3]
      %v243 = vld [vmem:[%s215 + $0x60] sm:$0xff]
      %v244 = vld [vmem:[%s215 + $0x68] sm:$0xff]
      %v245 = vld [vmem:[%s215 + $0x70] sm:$0x3]
      %v246 = vld [vmem:[%s215 + $0x78] sm:$0xff]
      %v247 = vld [vmem:[%s215 + $0x80] sm:$0xff]
      %v248 = vld [vmem:[%s215 + $0x88] sm:$0x3]
      %v249 = vld [vmem:[%s215 + $0x90] sm:$0xff]
      %v250 = vld [vmem:[%s215 + $0x98] sm:$0xff]
      %v251 = vld [vmem:[%s215 + $0xa0] sm:$0x3]
      %v252 = vld [vmem:[%s215 + $0xa8] sm:$0xff]
      %v253 = vld [vmem:[%s215 + $0xb0] sm:$0xff]
      %v254 = vld [vmem:[%s215 + $0xb8] sm:$0x3]
      %v255 = vld [vmem:[%s215 + $0xc0] sm:$0xff]
      %v256 = vld [vmem:[%s215 + $0xc8] sm:$0xff]
      %v257 = vld [vmem:[%s215 + $0xd0] sm:$0x3]
      %v258 = vld [vmem:[%s215 + $0xd8] sm:$0xff]
      %v259 = vld [vmem:[%s215 + $0xe0] sm:$0xff]
      %v260 = vld [vmem:[%s215 + $0xe8] sm:$0x3]
      %v261 = vld [vmem:[%s215 + $0xf0] sm:$0xff]
      %v262 = vld [vmem:[%s215 + $0xf8] sm:$0xff]
      %v263 = vld [vmem:[%s215 + $0x100] sm:$0x3]
      %v264 = vld [vmem:[%s215 + $0x108] sm:$0xff]
      %v265 = vld [vmem:[%s215 + $0x110] sm:$0xff]
      %v266 = vld [vmem:[%s215 + $0x118] sm:$0x3]
      %v267 = vld [vmem:[%s215 + $0x120] sm:$0xff]
      %v268 = vld [vmem:[%s215 + $0x128] sm:$0xff]
      %v269 = vld [vmem:[%s215 + $0x130] sm:$0x3]
      %v270 = vld [vmem:[%s215 + $0x138] sm:$0xff]
      %v271 = vld [vmem:[%s215 + $0x140] sm:$0xff]
      %v272 = vld [vmem:[%s215 + $0x148] sm:$0x3]
      %v273 = vld [vmem:[%s215 + $0x150] sm:$0xff]
      %v274 = vld [vmem:[%s215 + $0x158] sm:$0xff]
      %v275 = vld [vmem:[%s215 + $0x160] sm:$0x3]
      %v276 = vld [vmem:[%s215 + $0x168] sm:$0xff]
      %v277 = vld [vmem:[%s215 + $0x170] sm:$0xff]
      %v278 = vld [vmem:[%s215 + $0x178] sm:$0x3]
      %v279 = vld [vmem:[%s215 + $0x180] sm:$0xff]
      %v280 = vld [vmem:[%s215 + $0x188] sm:$0xff]
      %v281 = vld [vmem:[%s215 + $0x190] sm:$0x3]
      %v282 = vld [vmem:[%s215 + $0x198] sm:$0xff]
      %v283 = vld [vmem:[%s215 + $0x1a0] sm:$0xff]
      %v284 = vld [vmem:[%s215 + $0x1a8] sm:$0x3]
      %vm333 = vcmask 1046528
      %v334 = vrot.slane %v231, 1
      %v335 = vrot.slane %v232, 1
      %v336 = vsel %vm333, %v334, %v335
      %v337 = vrot.slane %v233, 1
      %v338 = vsel %vm333, %v335, %v337
      %v339 = vrot.slane %v234, 1
      %v340 = vrot.slane %v235, 1
      %v341 = vsel %vm333, %v339, %v340
      %v342 = vrot.slane %v236, 1
      %v343 = vsel %vm333, %v340, %v342
      %v344 = vrot.slane %v237, 1
      %v345 = vrot.slane %v238, 1
      %v346 = vsel %vm333, %v344, %v345
      %v347 = vrot.slane %v239, 1
      %v348 = vsel %vm333, %v345, %v347
      %v349 = vrot.slane %v240, 1
      %v350 = vrot.slane %v241, 1
      %v351 = vsel %vm333, %v349, %v350
      %v352 = vrot.slane %v242, 1
      %v353 = vsel %vm333, %v350, %v352
      %v354 = vrot.slane %v243, 1
      %v355 = vrot.slane %v244, 1
      %v356 = vsel %vm333, %v354, %v355
      %v357 = vrot.slane %v245, 1
      %v358 = vsel %vm333, %v355, %v357
      %v359 = vrot.slane %v246, 1
      %v360 = vrot.slane %v247, 1
      %v361 = vsel %vm333, %v359, %v360
      %v362 = vrot.slane %v248, 1
      %v363 = vsel %vm333, %v360, %v362
      %v364 = vrot.slane %v249, 1
      %v365 = vrot.slane %v250, 1
      %v366 = vsel %vm333, %v364, %v365
      %v367 = vrot.slane %v251, 1
      %v368 = vsel %vm333, %v365, %v367
      %v369 = vrot.slane %v252, 1
      %v370 = vrot.slane %v253, 1
      %v371 = vsel %vm333, %v369, %v370
      %v372 = vrot.slane %v254, 1
      %v373 = vsel %vm333, %v370, %v372
      %v374 = vrot.slane %v255, 1
      %v375 = vrot.slane %v256, 1
      %v376 = vsel %vm333, %v374, %v375
      %v377 = vrot.slane %v257, 1
      %v378 = vsel %vm333, %v375, %v377
      %v379 = vrot.slane %v258, 1
      %v380 = vrot.slane %v259, 1
      %v381 = vsel %vm333, %v379, %v380
      %v382 = vrot.slane %v260, 1
      %v383 = vsel %vm333, %v380, %v382
      %v384 = vrot.slane %v261, 1
      %v385 = vrot.slane %v262, 1
      %v386 = vsel %vm333, %v384, %v385
      %v387 = vrot.slane %v263, 1
      %v388 = vsel %vm333, %v385, %v387
      %v389 = vrot.slane %v264, 1
      %v390 = vrot.slane %v265, 1
      %v391 = vsel %vm333, %v389, %v390
      %v392 = vrot.slane %v266, 1
      %v393 = vsel %vm333, %v390, %v392
      %v394 = vrot.slane %v267, 1
      %v395 = vrot.slane %v268, 1
      %v396 = vsel %vm333, %v394, %v395
      %v397 = vrot.slane %v269, 1
      %v398 = vsel %vm333, %v395, %v397
      %v399 = vrot.slane %v270, 1
      %v400 = vrot.slane %v271, 1
      %v401 = vsel %vm333, %v399, %v400
      %v402 = vrot.slane %v272, 1
      %v403 = vsel %vm333, %v400, %v402
      %v404 = vrot.slane %v273, 1
      %v405 = vrot.slane %v274, 1
      %v406 = vsel %vm333, %v404, %v405
      %v407 = vrot.slane %v275, 1
      %v408 = vsel %vm333, %v405, %v407
      %v409 = vrot.slane %v276, 1
      %v410 = vrot.slane %v277, 1
      %v411 = vsel %vm333, %v409, %v410
      %v412 = vrot.slane %v278, 1
      %v413 = vsel %vm333, %v410, %v412
      %v417 = vrot.slane %v279, 1
      %v418 = vrot.slane %v280, 1
      %v419 = vsel %vm333, %v417, %v418
      %v420 = vrot.slane %v281, 1
      %v421 = vsel %vm333, %v418, %v420
      %v425 = vrot.slane %v282, 1
      %v426 = vrot.slane %v283, 1
      %v427 = vsel %vm333, %v425, %v426
      %v428 = vrot.slane %v284, 1
      %v429 = vsel %vm333, %v426, %v428
      %vm430 = vcmask 1045504
      %v431 = vrot.slane %v231, 2
      %v432 = vrot.slane %v232, 2
      %v433 = vsel %vm430, %v431, %v432
      %v434 = vrot.slane %v233, 2
      %v435 = vsel %vm430, %v432, %v434
      %v436 = vrot.slane %v234, 2
      %v437 = vrot.slane %v235, 2
      %v438 = vsel %vm430, %v436, %v437
      %v439 = vrot.slane %v236, 2
      %v440 = vsel %vm430, %v437, %v439
      %v441 = vrot.slane %v237, 2
      %v442 = vrot.slane %v238, 2
      %v443 = vsel %vm430, %v441, %v442
      %v444 = vrot.slane %v239, 2
      %v445 = vsel %vm430, %v442, %v444
      %v446 = vrot.slane %v240, 2
      %v447 = vrot.slane %v241, 2
      %v448 = vsel %vm430, %v446, %v447
      %v449 = vrot.slane %v242, 2
      %v450 = vsel %vm430, %v447, %v449
      %v451 = vrot.slane %v243, 2
      %v452 = vrot.slane %v244, 2
      %v453 = vsel %vm430, %v451, %v452
      %v454 = vrot.slane %v245, 2
      %v455 = vsel %vm430, %v452, %v454
      %v456 = vrot.slane %v246, 2
      %v457 = vrot.slane %v247, 2
      %v458 = vsel %vm430, %v456, %v457
      %v459 = vrot.slane %v248, 2
      %v460 = vsel %vm430, %v457, %v459
      %v461 = vrot.slane %v249, 2
      %v462 = vrot.slane %v250, 2
      %v463 = vsel %vm430, %v461, %v462
      %v464 = vrot.slane %v251, 2
      %v465 = vsel %vm430, %v462, %v464
      %v466 = vrot.slane %v252, 2
      %v467 = vrot.slane %v253, 2
      %v468 = vsel %vm430, %v466, %v467
      %v469 = vrot.slane %v254, 2
      %v470 = vsel %vm430, %v467, %v469
      %v471 = vrot.slane %v255, 2
      %v472 = vrot.slane %v256, 2
      %v473 = vsel %vm430, %v471, %v472
      %v474 = vrot.slane %v257, 2
      %v475 = vsel %vm430, %v472, %v474
      %v476 = vrot.slane %v258, 2
      %v477 = vrot.slane %v259, 2
      %v478 = vsel %vm430, %v476, %v477
      %v479 = vrot.slane %v260, 2
      %v480 = vsel %vm430, %v477, %v479
      %v481 = vrot.slane %v261, 2
      %v482 = vrot.slane %v262, 2
      %v483 = vsel %vm430, %v481, %v482
      %v484 = vrot.slane %v263, 2
      %v485 = vsel %vm430, %v482, %v484
      %v486 = vrot.slane %v264, 2
      %v487 = vrot.slane %v265, 2
      %v488 = vsel %vm430, %v486, %v487
      %v489 = vrot.slane %v266, 2
      %v490 = vsel %vm430, %v487, %v489
      %v491 = vrot.slane %v267, 2
      %v492 = vrot.slane %v268, 2
      %v493 = vsel %vm430, %v491, %v492
      %v494 = vrot.slane %v269, 2
      %v495 = vsel %vm430, %v492, %v494
      %v496 = vrot.slane %v270, 2
      %v497 = vrot.slane %v271, 2
      %v498 = vsel %vm430, %v496, %v497
      %v499 = vrot.slane %v272, 2
      %v500 = vsel %vm430, %v497, %v499
      %v501 = vrot.slane %v273, 2
      %v502 = vrot.slane %v274, 2
      %v503 = vsel %vm430, %v501, %v502
      %v504 = vrot.slane %v275, 2
      %v505 = vsel %vm430, %v502, %v504
      %v506 = vrot.slane %v276, 2
      %v507 = vrot.slane %v277, 2
      %v508 = vsel %vm430, %v506, %v507
      %v509 = vrot.slane %v278, 2
      %v510 = vsel %vm430, %v507, %v509
      %v511 = vrot.slane %v279, 2
      %v512 = vrot.slane %v280, 2
      %v513 = vsel %vm430, %v511, %v512
      %v514 = vrot.slane %v281, 2
      %v515 = vsel %vm430, %v512, %v514
      %v516 = vrot.slane %v282, 2
      %v517 = vrot.slane %v283, 2
      %v518 = vsel %vm430, %v516, %v517
      %v519 = vrot.slane %v284, 2
      %v520 = vsel %vm430, %v517, %v519
      %521 = vrot.lane.b32.xlu0 %v234, 12
      %v522 = vpop.permute.xlu0 %521
      %523 = vrot.lane.b32.xlu0 %v235, 12
      %v524 = vpop.permute.xlu0 %523
      %525 = vrot.lane.b32.xlu0 %v237, 12
      %v526 = vpop.permute.xlu0 %525
      %527 = vrot.lane.b32.xlu0 %v238, 12
      %v528 = vpop.permute.xlu0 %527
      %529 = vrot.lane.b32.xlu0 %v240, 12
      %v530 = vpop.permute.xlu0 %529
      %531 = vrot.lane.b32.xlu0 %v241, 12
      %v532 = vpop.permute.xlu0 %531
      %533 = vrot.lane.b32.xlu0 %v243, 12
      %v534 = vpop.permute.xlu0 %533
      %535 = vrot.lane.b32.xlu0 %v244, 12
      %v536 = vpop.permute.xlu0 %535
      %537 = vrot.lane.b32.xlu0 %v246, 12
      %v538 = vpop.permute.xlu0 %537
      %539 = vrot.lane.b32.xlu0 %v247, 12
      %v540 = vpop.permute.xlu0 %539
      %541 = vrot.lane.b32.xlu0 %v249, 12
      %v542 = vpop.permute.xlu0 %541
      %543 = vrot.lane.b32.xlu0 %v250, 12
      %v544 = vpop.permute.xlu0 %543
      %545 = vrot.lane.b32.xlu0 %v252, 12
      %v546 = vpop.permute.xlu0 %545
      %547 = vrot.lane.b32.xlu0 %v253, 12
      %v548 = vpop.permute.xlu0 %547
      %549 = vrot.lane.b32.xlu0 %v255, 12
      %v550 = vpop.permute.xlu0 %549
      %551 = vrot.lane.b32.xlu0 %v256, 12
      %v552 = vpop.permute.xlu0 %551
      %553 = vrot.lane.b32.xlu0 %v258, 12
      %v554 = vpop.permute.xlu0 %553
      %555 = vrot.lane.b32.xlu0 %v259, 12
      %v556 = vpop.permute.xlu0 %555
      %557 = vrot.lane.b32.xlu0 %v261, 12
      %v558 = vpop.permute.xlu0 %557
      %559 = vrot.lane.b32.xlu0 %v262, 12
      %v560 = vpop.permute.xlu0 %559
      %561 = vrot.lane.b32.xlu0 %v264, 12
      %v562 = vpop.permute.xlu0 %561
      %563 = vrot.lane.b32.xlu0 %v265, 12
      %v564 = vpop.permute.xlu0 %563
      %565 = vrot.lane.b32.xlu0 %v267, 12
      %v566 = vpop.permute.xlu0 %565
      %567 = vrot.lane.b32.xlu0 %v268, 12
      %v568 = vpop.permute.xlu0 %567
      %569 = vrot.lane.b32.xlu0 %v270, 12
      %v570 = vpop.permute.xlu0 %569
      %571 = vrot.lane.b32.xlu0 %v271, 12
      %v572 = vpop.permute.xlu0 %571
      %573 = vrot.lane.b32.xlu0 %v273, 12
      %v574 = vpop.permute.xlu0 %573
      %575 = vrot.lane.b32.xlu0 %v274, 12
      %v576 = vpop.permute.xlu0 %575
      %577 = vrot.lane.b32.xlu0 %v276, 12
      %v578 = vpop.permute.xlu0 %577
      %579 = vrot.lane.b32.xlu0 %v277, 12
      %v580 = vpop.permute.xlu0 %579
      %581 = vrot.lane.b32.xlu0 %v279, 12
      %v582 = vpop.permute.xlu0 %581
      %583 = vrot.lane.b32.xlu0 %v280, 12
      %v584 = vpop.permute.xlu0 %583
      %617 = vrot.lane.b32.xlu0 %v237, 24
      %v618 = vpop.permute.xlu0 %617
      %619 = vrot.lane.b32.xlu0 %v238, 24
      %v620 = vpop.permute.xlu0 %619
      %621 = vrot.lane.b32.xlu0 %v240, 24
      %v622 = vpop.permute.xlu0 %621
      %623 = vrot.lane.b32.xlu0 %v241, 24
      %v624 = vpop.permute.xlu0 %623
      %625 = vrot.lane.b32.xlu0 %v243, 24
      %v626 = vpop.permute.xlu0 %625
      %627 = vrot.lane.b32.xlu0 %v244, 24
      %v628 = vpop.permute.xlu0 %627
      %629 = vrot.lane.b32.xlu0 %v246, 24
      %v630 = vpop.permute.xlu0 %629
      %631 = vrot.lane.b32.xlu0 %v247, 24
      %v632 = vpop.permute.xlu0 %631
      %633 = vrot.lane.b32.xlu0 %v249, 24
      %v634 = vpop.permute.xlu0 %633
      %635 = vrot.lane.b32.xlu0 %v250, 24
      %v636 = vpop.permute.xlu0 %635
      %637 = vrot.lane.b32.xlu0 %v252, 24
      %v638 = vpop.permute.xlu0 %637
      %639 = vrot.lane.b32.xlu0 %v253, 24
      %v640 = vpop.permute.xlu0 %639
      %641 = vrot.lane.b32.xlu0 %v255, 24
      %v642 = vpop.permute.xlu0 %641
      %643 = vrot.lane.b32.xlu0 %v256, 24
      %v644 = vpop.permute.xlu0 %643
      %645 = vrot.lane.b32.xlu0 %v258, 24
      %v646 = vpop.permute.xlu0 %645
      %647 = vrot.lane.b32.xlu0 %v259, 24
      %v648 = vpop.permute.xlu0 %647
      %649 = vrot.lane.b32.xlu0 %v261, 24
      %v650 = vpop.permute.xlu0 %649
      %651 = vrot.lane.b32.xlu0 %v262, 24
      %v652 = vpop.permute.xlu0 %651
      %653 = vrot.lane.b32.xlu0 %v264, 24
      %v654 = vpop.permute.xlu0 %653
      %655 = vrot.lane.b32.xlu0 %v265, 24
      %v656 = vpop.permute.xlu0 %655
      %657 = vrot.lane.b32.xlu0 %v267, 24
      %v658 = vpop.permute.xlu0 %657
      %659 = vrot.lane.b32.xlu0 %v268, 24
      %v660 = vpop.permute.xlu0 %659
      %661 = vrot.lane.b32.xlu0 %v270, 24
      %v662 = vpop.permute.xlu0 %661
      %663 = vrot.lane.b32.xlu0 %v271, 24
      %v664 = vpop.permute.xlu0 %663
      %665 = vrot.lane.b32.xlu0 %v273, 24
      %v666 = vpop.permute.xlu0 %665
      %667 = vrot.lane.b32.xlu0 %v274, 24
      %v668 = vpop.permute.xlu0 %667
      %669 = vrot.lane.b32.xlu0 %v276, 24
      %v670 = vpop.permute.xlu0 %669
      %671 = vrot.lane.b32.xlu0 %v277, 24
      %v672 = vpop.permute.xlu0 %671
      %673 = vrot.lane.b32.xlu0 %v279, 24
      %v674 = vpop.permute.xlu0 %673
      %675 = vrot.lane.b32.xlu0 %v280, 24
      %v676 = vpop.permute.xlu0 %675
      %677 = vrot.lane.b32.xlu0 %v282, 24
      %v678 = vpop.permute.xlu0 %677
      %679 = vrot.lane.b32.xlu0 %v283, 24
      %v680 = vpop.permute.xlu0 %679
      %713 = vrot.lane.b32.xlu0 %v336, 36
      %v714 = vpop.permute.xlu0 %713
      %715 = vrot.lane.b32.xlu0 %v338, 36
      %v716 = vpop.permute.xlu0 %715
      %717 = vrot.lane.b32.xlu0 %v341, 36
      %v718 = vpop.permute.xlu0 %717
      %719 = vrot.lane.b32.xlu0 %v343, 36
      %v720 = vpop.permute.xlu0 %719
      %721 = vrot.lane.b32.xlu0 %v346, 36
      %v722 = vpop.permute.xlu0 %721
      %723 = vrot.lane.b32.xlu0 %v348, 36
      %v724 = vpop.permute.xlu0 %723
      %725 = vrot.lane.b32.xlu0 %v351, 36
      %v726 = vpop.permute.xlu0 %725
      %727 = vrot.lane.b32.xlu0 %v353, 36
      %v728 = vpop.permute.xlu0 %727
      %729 = vrot.lane.b32.xlu0 %v356, 36
      %v730 = vpop.permute.xlu0 %729
      %731 = vrot.lane.b32.xlu0 %v358, 36
      %v732 = vpop.permute.xlu0 %731
      %733 = vrot.lane.b32.xlu0 %v361, 36
      %v734 = vpop.permute.xlu0 %733
      %735 = vrot.lane.b32.xlu0 %v363, 36
      %v736 = vpop.permute.xlu0 %735
      %737 = vrot.lane.b32.xlu0 %v366, 36
      %v738 = vpop.permute.xlu0 %737
      %739 = vrot.lane.b32.xlu0 %v368, 36
      %v740 = vpop.permute.xlu0 %739
      %741 = vrot.lane.b32.xlu0 %v371, 36
      %v742 = vpop.permute.xlu0 %741
      %743 = vrot.lane.b32.xlu0 %v373, 36
      %v744 = vpop.permute.xlu0 %743
      %745 = vrot.lane.b32.xlu0 %v376, 36
      %v746 = vpop.permute.xlu0 %745
      %747 = vrot.lane.b32.xlu0 %v378, 36
      %v748 = vpop.permute.xlu0 %747
      %749 = vrot.lane.b32.xlu0 %v381, 36
      %v750 = vpop.permute.xlu0 %749
      %751 = vrot.lane.b32.xlu0 %v383, 36
      %v752 = vpop.permute.xlu0 %751
      %753 = vrot.lane.b32.xlu0 %v386, 36
      %v754 = vpop.permute.xlu0 %753
      %755 = vrot.lane.b32.xlu0 %v388, 36
      %v756 = vpop.permute.xlu0 %755
      %757 = vrot.lane.b32.xlu0 %v391, 36
      %v758 = vpop.permute.xlu0 %757
      %759 = vrot.lane.b32.xlu0 %v393, 36
      %v760 = vpop.permute.xlu0 %759
      %761 = vrot.lane.b32.xlu0 %v396, 36
      %v762 = vpop.permute.xlu0 %761
      %763 = vrot.lane.b32.xlu0 %v398, 36
      %v764 = vpop.permute.xlu0 %763
      %765 = vrot.lane.b32.xlu0 %v401, 36
      %v766 = vpop.permute.xlu0 %765
      %767 = vrot.lane.b32.xlu0 %v403, 36
      %v768 = vpop.permute.xlu0 %767
      %769 = vrot.lane.b32.xlu0 %v406, 36
      %v770 = vpop.permute.xlu0 %769
      %771 = vrot.lane.b32.xlu0 %v408, 36
      %v772 = vpop.permute.xlu0 %771
      %773 = vrot.lane.b32.xlu0 %v411, 36
      %v774 = vpop.permute.xlu0 %773
      %775 = vrot.lane.b32.xlu0 %v413, 36
      %v776 = vpop.permute.xlu0 %775
      %809 = vrot.lane.b32.xlu0 %v341, 48
      %v810 = vpop.permute.xlu0 %809
      %811 = vrot.lane.b32.xlu0 %v343, 48
      %v812 = vpop.permute.xlu0 %811
      %813 = vrot.lane.b32.xlu0 %v346, 48
      %v814 = vpop.permute.xlu0 %813
      %815 = vrot.lane.b32.xlu0 %v348, 48
      %v816 = vpop.permute.xlu0 %815
      %817 = vrot.lane.b32.xlu0 %v351, 48
      %v818 = vpop.permute.xlu0 %817
      %819 = vrot.lane.b32.xlu0 %v353, 48
      %v820 = vpop.permute.xlu0 %819
      %821 = vrot.lane.b32.xlu0 %v356, 48
      %v822 = vpop.permute.xlu0 %821
      %823 = vrot.lane.b32.xlu0 %v358, 48
      %v824 = vpop.permute.xlu0 %823
      %825 = vrot.lane.b32.xlu0 %v361, 48
      %v826 = vpop.permute.xlu0 %825
      %827 = vrot.lane.b32.xlu0 %v363, 48
      %v828 = vpop.permute.xlu0 %827
      %829 = vrot.lane.b32.xlu0 %v366, 48
      %v830 = vpop.permute.xlu0 %829
      %831 = vrot.lane.b32.xlu0 %v368, 48
      %v832 = vpop.permute.xlu0 %831
      %833 = vrot.lane.b32.xlu0 %v371, 48
      %v834 = vpop.permute.xlu0 %833
      %835 = vrot.lane.b32.xlu0 %v373, 48
      %v836 = vpop.permute.xlu0 %835
      %837 = vrot.lane.b32.xlu0 %v376, 48
      %v838 = vpop.permute.xlu0 %837
      %839 = vrot.lane.b32.xlu0 %v378, 48
      %v840 = vpop.permute.xlu0 %839
      %841 = vrot.lane.b32.xlu0 %v381, 48
      %v842 = vpop.permute.xlu0 %841
      %843 = vrot.lane.b32.xlu0 %v383, 48
      %v844 = vpop.permute.xlu0 %843
      %845 = vrot.lane.b32.xlu0 %v386, 48
      %v846 = vpop.permute.xlu0 %845
      %847 = vrot.lane.b32.xlu0 %v388, 48
      %v848 = vpop.permute.xlu0 %847
      %849 = vrot.lane.b32.xlu0 %v391, 48
      %v850 = vpop.permute.xlu0 %849
      %851 = vrot.lane.b32.xlu0 %v393, 48
      %v852 = vpop.permute.xlu0 %851
      %853 = vrot.lane.b32.xlu0 %v396, 48
      %v854 = vpop.permute.xlu0 %853
      %855 = vrot.lane.b32.xlu0 %v398, 48
      %v856 = vpop.permute.xlu0 %855
      %857 = vrot.lane.b32.xlu0 %v401, 48
      %v858 = vpop.permute.xlu0 %857
      %859 = vrot.lane.b32.xlu0 %v403, 48
      %v860 = vpop.permute.xlu0 %859
      %861 = vrot.lane.b32.xlu0 %v406, 48
      %v862 = vpop.permute.xlu0 %861
      %863 = vrot.lane.b32.xlu0 %v408, 48
      %v864 = vpop.permute.xlu0 %863
      %865 = vrot.lane.b32.xlu0 %v411, 48
      %v866 = vpop.permute.xlu0 %865
      %867 = vrot.lane.b32.xlu0 %v413, 48
      %v868 = vpop.permute.xlu0 %867
      %869 = vrot.lane.b32.xlu0 %v419, 48
      %v870 = vpop.permute.xlu0 %869
      %871 = vrot.lane.b32.xlu0 %v421, 48
      %v872 = vpop.permute.xlu0 %871
      %905 = vrot.lane.b32.xlu0 %v346, 60
      %v906 = vpop.permute.xlu0 %905
      %907 = vrot.lane.b32.xlu0 %v348, 60
      %v908 = vpop.permute.xlu0 %907
      %909 = vrot.lane.b32.xlu0 %v351, 60
      %v910 = vpop.permute.xlu0 %909
      %911 = vrot.lane.b32.xlu0 %v353, 60
      %v912 = vpop.permute.xlu0 %911
      %913 = vrot.lane.b32.xlu0 %v356, 60
      %v914 = vpop.permute.xlu0 %913
      %915 = vrot.lane.b32.xlu0 %v358, 60
      %v916 = vpop.permute.xlu0 %915
      %917 = vrot.lane.b32.xlu0 %v361, 60
      %v918 = vpop.permute.xlu0 %917
      %919 = vrot.lane.b32.xlu0 %v363, 60
      %v920 = vpop.permute.xlu0 %919
      %921 = vrot.lane.b32.xlu0 %v366, 60
      %v922 = vpop.permute.xlu0 %921
      %923 = vrot.lane.b32.xlu0 %v368, 60
      %v924 = vpop.permute.xlu0 %923
      %925 = vrot.lane.b32.xlu0 %v371, 60
      %v926 = vpop.permute.xlu0 %925
      %927 = vrot.lane.b32.xlu0 %v373, 60
      %v928 = vpop.permute.xlu0 %927
      %929 = vrot.lane.b32.xlu0 %v376, 60
      %v930 = vpop.permute.xlu0 %929
      %931 = vrot.lane.b32.xlu0 %v378, 60
      %v932 = vpop.permute.xlu0 %931
      %933 = vrot.lane.b32.xlu0 %v381, 60
      %v934 = vpop.permute.xlu0 %933
      %935 = vrot.lane.b32.xlu0 %v383, 60
      %v936 = vpop.permute.xlu0 %935
      %937 = vrot.lane.b32.xlu0 %v386, 60
      %v938 = vpop.permute.xlu0 %937
      %939 = vrot.lane.b32.xlu0 %v388, 60
      %v940 = vpop.permute.xlu0 %939
      %941 = vrot.lane.b32.xlu0 %v391, 60
      %v942 = vpop.permute.xlu0 %941
      %943 = vrot.lane.b32.xlu0 %v393, 60
      %v944 = vpop.permute.xlu0 %943
      %945 = vrot.lane.b32.xlu0 %v396, 60
      %v946 = vpop.permute.xlu0 %945
      %947 = vrot.lane.b32.xlu0 %v398, 60
      %v948 = vpop.permute.xlu0 %947
      %949 = vrot.lane.b32.xlu0 %v401, 60
      %v950 = vpop.permute.xlu0 %949
      %951 = vrot.lane.b32.xlu0 %v403, 60
      %v952 = vpop.permute.xlu0 %951
      %953 = vrot.lane.b32.xlu0 %v406, 60
      %v954 = vpop.permute.xlu0 %953
      %955 = vrot.lane.b32.xlu0 %v408, 60
      %v956 = vpop.permute.xlu0 %955
      %957 = vrot.lane.b32.xlu0 %v411, 60
      %v958 = vpop.permute.xlu0 %957
      %959 = vrot.lane.b32.xlu0 %v413, 60
      %v960 = vpop.permute.xlu0 %959
      %961 = vrot.lane.b32.xlu0 %v419, 60
      %v962 = vpop.permute.xlu0 %961
      %963 = vrot.lane.b32.xlu0 %v421, 60
      %v964 = vpop.permute.xlu0 %963
      %965 = vrot.lane.b32.xlu0 %v427, 60
      %v966 = vpop.permute.xlu0 %965
      %967 = vrot.lane.b32.xlu0 %v429, 60
      %v968 = vpop.permute.xlu0 %967
      %1001 = vrot.lane.b32.xlu0 %v433, 72
      %v1002 = vpop.permute.xlu0 %1001
      %1003 = vrot.lane.b32.xlu0 %v435, 72
      %v1004 = vpop.permute.xlu0 %1003
      %1005 = vrot.lane.b32.xlu0 %v438, 72
      %v1006 = vpop.permute.xlu0 %1005
      %1007 = vrot.lane.b32.xlu0 %v440, 72
      %v1008 = vpop.permute.xlu0 %1007
      %1009 = vrot.lane.b32.xlu0 %v443, 72
      %v1010 = vpop.permute.xlu0 %1009
      %1011 = vrot.lane.b32.xlu0 %v445, 72
      %v1012 = vpop.permute.xlu0 %1011
      %1013 = vrot.lane.b32.xlu0 %v448, 72
      %v1014 = vpop.permute.xlu0 %1013
      %1015 = vrot.lane.b32.xlu0 %v450, 72
      %v1016 = vpop.permute.xlu0 %1015
      %1017 = vrot.lane.b32.xlu0 %v453, 72
      %v1018 = vpop.permute.xlu0 %1017
      %1019 = vrot.lane.b32.xlu0 %v455, 72
      %v1020 = vpop.permute.xlu0 %1019
      %1021 = vrot.lane.b32.xlu0 %v458, 72
      %v1022 = vpop.permute.xlu0 %1021
      %1023 = vrot.lane.b32.xlu0 %v460, 72
      %v1024 = vpop.permute.xlu0 %1023
      %1025 = vrot.lane.b32.xlu0 %v463, 72
      %v1026 = vpop.permute.xlu0 %1025
      %1027 = vrot.lane.b32.xlu0 %v465, 72
      %v1028 = vpop.permute.xlu0 %1027
      %1029 = vrot.lane.b32.xlu0 %v468, 72
      %v1030 = vpop.permute.xlu0 %1029
      %1031 = vrot.lane.b32.xlu0 %v470, 72
      %v1032 = vpop.permute.xlu0 %1031
      %1033 = vrot.lane.b32.xlu0 %v473, 72
      %v1034 = vpop.permute.xlu0 %1033
      %1035 = vrot.lane.b32.xlu0 %v475, 72
      %v1036 = vpop.permute.xlu0 %1035
      %1037 = vrot.lane.b32.xlu0 %v478, 72
      %v1038 = vpop.permute.xlu0 %1037
      %1039 = vrot.lane.b32.xlu0 %v480, 72
      %v1040 = vpop.permute.xlu0 %1039
      %1041 = vrot.lane.b32.xlu0 %v483, 72
      %v1042 = vpop.permute.xlu0 %1041
      %1043 = vrot.lane.b32.xlu0 %v485, 72
      %v1044 = vpop.permute.xlu0 %1043
      %1045 = vrot.lane.b32.xlu0 %v488, 72
      %v1046 = vpop.permute.xlu0 %1045
      %1047 = vrot.lane.b32.xlu0 %v490, 72
      %v1048 = vpop.permute.xlu0 %1047
      %1049 = vrot.lane.b32.xlu0 %v493, 72
      %v1050 = vpop.permute.xlu0 %1049
      %1051 = vrot.lane.b32.xlu0 %v495, 72
      %v1052 = vpop.permute.xlu0 %1051
      %1053 = vrot.lane.b32.xlu0 %v498, 72
      %v1054 = vpop.permute.xlu0 %1053
      %1055 = vrot.lane.b32.xlu0 %v500, 72
      %v1056 = vpop.permute.xlu0 %1055
      %1057 = vrot.lane.b32.xlu0 %v503, 72
      %v1058 = vpop.permute.xlu0 %1057
      %1059 = vrot.lane.b32.xlu0 %v505, 72
      %v1060 = vpop.permute.xlu0 %1059
      %1061 = vrot.lane.b32.xlu0 %v508, 72
      %v1062 = vpop.permute.xlu0 %1061
      %1063 = vrot.lane.b32.xlu0 %v510, 72
      %v1064 = vpop.permute.xlu0 %1063
      %1097 = vrot.lane.b32.xlu0 %v438, 84
      %v1098 = vpop.permute.xlu0 %1097
      %1099 = vrot.lane.b32.xlu0 %v440, 84
      %v1100 = vpop.permute.xlu0 %1099
      %1101 = vrot.lane.b32.xlu0 %v443, 84
      %v1102 = vpop.permute.xlu0 %1101
      %1103 = vrot.lane.b32.xlu0 %v445, 84
      %v1104 = vpop.permute.xlu0 %1103
      %1105 = vrot.lane.b32.xlu0 %v448, 84
      %v1106 = vpop.permute.xlu0 %1105
      %1107 = vrot.lane.b32.xlu0 %v450, 84
      %v1108 = vpop.permute.xlu0 %1107
      %1109 = vrot.lane.b32.xlu0 %v453, 84
      %v1110 = vpop.permute.xlu0 %1109
      %1111 = vrot.lane.b32.xlu0 %v455, 84
      %v1112 = vpop.permute.xlu0 %1111
      %1113 = vrot.lane.b32.xlu0 %v458, 84
      %v1114 = vpop.permute.xlu0 %1113
      %1115 = vrot.lane.b32.xlu0 %v460, 84
      %v1116 = vpop.permute.xlu0 %1115
      %1117 = vrot.lane.b32.xlu0 %v463, 84
      %v1118 = vpop.permute.xlu0 %1117
      %1119 = vrot.lane.b32.xlu0 %v465, 84
      %v1120 = vpop.permute.xlu0 %1119
      %1121 = vrot.lane.b32.xlu0 %v468, 84
      %v1122 = vpop.permute.xlu0 %1121
      %1123 = vrot.lane.b32.xlu0 %v470, 84
      %v1124 = vpop.permute.xlu0 %1123
      %1125 = vrot.lane.b32.xlu0 %v473, 84
      %v1126 = vpop.permute.xlu0 %1125
      %1127 = vrot.lane.b32.xlu0 %v475, 84
      %v1128 = vpop.permute.xlu0 %1127
      %1129 = vrot.lane.b32.xlu0 %v478, 84
      %v1130 = vpop.permute.xlu0 %1129
      %1131 = vrot.lane.b32.xlu0 %v480, 84
      %v1132 = vpop.permute.xlu0 %1131
      %1133 = vrot.lane.b32.xlu0 %v483, 84
      %v1134 = vpop.permute.xlu0 %1133
      %1135 = vrot.lane.b32.xlu0 %v485, 84
      %v1136 = vpop.permute.xlu0 %1135
      %1137 = vrot.lane.b32.xlu0 %v488, 84
      %v1138 = vpop.permute.xlu0 %1137
      %1139 = vrot.lane.b32.xlu0 %v490, 84
      %v1140 = vpop.permute.xlu0 %1139
      %1141 = vrot.lane.b32.xlu0 %v493, 84
      %v1142 = vpop.permute.xlu0 %1141
      %1143 = vrot.lane.b32.xlu0 %v495, 84
      %v1144 = vpop.permute.xlu0 %1143
      %1145 = vrot.lane.b32.xlu0 %v498, 84
      %v1146 = vpop.permute.xlu0 %1145
      %1147 = vrot.lane.b32.xlu0 %v500, 84
      %v1148 = vpop.permute.xlu0 %1147
      %1149 = vrot.lane.b32.xlu0 %v503, 84
      %v1150 = vpop.permute.xlu0 %1149
      %1151 = vrot.lane.b32.xlu0 %v505, 84
      %v1152 = vpop.permute.xlu0 %1151
      %1153 = vrot.lane.b32.xlu0 %v508, 84
      %v1154 = vpop.permute.xlu0 %1153
      %1155 = vrot.lane.b32.xlu0 %v510, 84
      %v1156 = vpop.permute.xlu0 %1155
      %1157 = vrot.lane.b32.xlu0 %v513, 84
      %v1158 = vpop.permute.xlu0 %1157
      %1159 = vrot.lane.b32.xlu0 %v515, 84
      %v1160 = vpop.permute.xlu0 %1159
      %1193 = vrot.lane.b32.xlu0 %v443, 96
      %v1194 = vpop.permute.xlu0 %1193
      %1195 = vrot.lane.b32.xlu0 %v445, 96
      %v1196 = vpop.permute.xlu0 %1195
      %1197 = vrot.lane.b32.xlu0 %v448, 96
      %v1198 = vpop.permute.xlu0 %1197
      %1199 = vrot.lane.b32.xlu0 %v450, 96
      %v1200 = vpop.permute.xlu0 %1199
      %1201 = vrot.lane.b32.xlu0 %v453, 96
      %v1202 = vpop.permute.xlu0 %1201
      %1203 = vrot.lane.b32.xlu0 %v455, 96
      %v1204 = vpop.permute.xlu0 %1203
      %1205 = vrot.lane.b32.xlu0 %v458, 96
      %v1206 = vpop.permute.xlu0 %1205
      %1207 = vrot.lane.b32.xlu0 %v460, 96
      %v1208 = vpop.permute.xlu0 %1207
      %1209 = vrot.lane.b32.xlu0 %v463, 96
      %v1210 = vpop.permute.xlu0 %1209
      %1211 = vrot.lane.b32.xlu0 %v465, 96
      %v1212 = vpop.permute.xlu0 %1211
      %1213 = vrot.lane.b32.xlu0 %v468, 96
      %v1214 = vpop.permute.xlu0 %1213
      %1215 = vrot.lane.b32.xlu0 %v470, 96
      %v1216 = vpop.permute.xlu0 %1215
      %1217 = vrot.lane.b32.xlu0 %v473, 96
      %v1218 = vpop.permute.xlu0 %1217
      %1219 = vrot.lane.b32.xlu0 %v475, 96
      %v1220 = vpop.permute.xlu0 %1219
      %1221 = vrot.lane.b32.xlu0 %v478, 96
      %v1222 = vpop.permute.xlu0 %1221
      %1223 = vrot.lane.b32.xlu0 %v480, 96
      %v1224 = vpop.permute.xlu0 %1223
      %1225 = vrot.lane.b32.xlu0 %v483, 96
      %v1226 = vpop.permute.xlu0 %1225
      %1227 = vrot.lane.b32.xlu0 %v485, 96
      %v1228 = vpop.permute.xlu0 %1227
      %1229 = vrot.lane.b32.xlu0 %v488, 96
      %v1230 = vpop.permute.xlu0 %1229
      %1231 = vrot.lane.b32.xlu0 %v490, 96
      %v1232 = vpop.permute.xlu0 %1231
      %1233 = vrot.lane.b32.xlu0 %v493, 96
      %v1234 = vpop.permute.xlu0 %1233
      %1235 = vrot.lane.b32.xlu0 %v495, 96
      %v1236 = vpop.permute.xlu0 %1235
      %1237 = vrot.lane.b32.xlu0 %v498, 96
      %v1238 = vpop.permute.xlu0 %1237
      %1239 = vrot.lane.b32.xlu0 %v500, 96
      %v1240 = vpop.permute.xlu0 %1239
      %1241 = vrot.lane.b32.xlu0 %v503, 96
      %v1242 = vpop.permute.xlu0 %1241
      %1243 = vrot.lane.b32.xlu0 %v505, 96
      %v1244 = vpop.permute.xlu0 %1243
      %1245 = vrot.lane.b32.xlu0 %v508, 96
      %v1246 = vpop.permute.xlu0 %1245
      %1247 = vrot.lane.b32.xlu0 %v510, 96
      %v1248 = vpop.permute.xlu0 %1247
      %1249 = vrot.lane.b32.xlu0 %v513, 96
      %v1250 = vpop.permute.xlu0 %1249
      %1251 = vrot.lane.b32.xlu0 %v515, 96
      %v1252 = vpop.permute.xlu0 %1251
      %1253 = vrot.lane.b32.xlu0 %v518, 96
      %v1254 = vpop.permute.xlu0 %1253
      %1255 = vrot.lane.b32.xlu0 %v520, 96
      %v1256 = vpop.permute.xlu0 %1255
      %vm1289 = vcmask 97280
      %v1290 = vsel %vm1289, %v231, %v522
      %v1291 = vsel %vm1289, %v232, %v524
      %v1292 = vsel %vm1289, %v234, %v526
      %v1293 = vsel %vm1289, %v235, %v528
      %v1294 = vsel %vm1289, %v237, %v530
      %v1295 = vsel %vm1289, %v238, %v532
      %v1296 = vsel %vm1289, %v240, %v534
      %v1297 = vsel %vm1289, %v241, %v536
      %v1298 = vsel %vm1289, %v243, %v538
      %v1299 = vsel %vm1289, %v244, %v540
      %v1300 = vsel %vm1289, %v246, %v542
      %v1301 = vsel %vm1289, %v247, %v544
      %v1302 = vsel %vm1289, %v249, %v546
      %v1303 = vsel %vm1289, %v250, %v548
      %v1304 = vsel %vm1289, %v252, %v550
      %v1305 = vsel %vm1289, %v253, %v552
      %v1306 = vsel %vm1289, %v255, %v554
      %v1307 = vsel %vm1289, %v256, %v556
      %v1308 = vsel %vm1289, %v258, %v558
      %v1309 = vsel %vm1289, %v259, %v560
      %v1310 = vsel %vm1289, %v261, %v562
      %v1311 = vsel %vm1289, %v262, %v564
      %v1312 = vsel %vm1289, %v264, %v566
      %v1313 = vsel %vm1289, %v265, %v568
      %v1314 = vsel %vm1289, %v267, %v570
      %v1315 = vsel %vm1289, %v268, %v572
      %v1316 = vsel %vm1289, %v270, %v574
      %v1317 = vsel %vm1289, %v271, %v576
      %v1318 = vsel %vm1289, %v273, %v578
      %v1319 = vsel %vm1289, %v274, %v580
      %v1320 = vsel %vm1289, %v276, %v582
      %v1321 = vsel %vm1289, %v277, %v584
      %vm1322 = vcmask 195584
      %v1323 = vsel %vm1322, %v1290, %v618
      %v1324 = vsel %vm1322, %v1291, %v620
      %v1325 = vsel %vm1322, %v1292, %v622
      %v1326 = vsel %vm1322, %v1293, %v624
      %v1327 = vsel %vm1322, %v1294, %v626
      %v1328 = vsel %vm1322, %v1295, %v628
      %v1329 = vsel %vm1322, %v1296, %v630
      %v1330 = vsel %vm1322, %v1297, %v632
      %v1331 = vsel %vm1322, %v1298, %v634
      %v1332 = vsel %vm1322, %v1299, %v636
      %v1333 = vsel %vm1322, %v1300, %v638
      %v1334 = vsel %vm1322, %v1301, %v640
      %v1335 = vsel %vm1322, %v1302, %v642
      %v1336 = vsel %vm1322, %v1303, %v644
      %v1337 = vsel %vm1322, %v1304, %v646
      %v1338 = vsel %vm1322, %v1305, %v648
      %v1339 = vsel %vm1322, %v1306, %v650
      %v1340 = vsel %vm1322, %v1307, %v652
      %v1341 = vsel %vm1322, %v1308, %v654
      %v1342 = vsel %vm1322, %v1309, %v656
      %v1343 = vsel %vm1322, %v1310, %v658
      %v1344 = vsel %vm1322, %v1311, %v660
      %v1345 = vsel %vm1322, %v1312, %v662
      %v1346 = vsel %vm1322, %v1313, %v664
      %v1347 = vsel %vm1322, %v1314, %v666
      %v1348 = vsel %vm1322, %v1315, %v668
      %v1349 = vsel %vm1322, %v1316, %v670
      %v1350 = vsel %vm1322, %v1317, %v672
      %v1351 = vsel %vm1322, %v1318, %v674
      %v1352 = vsel %vm1322, %v1319, %v676
      %v1353 = vsel %vm1322, %v1320, %v678
      %v1354 = vsel %vm1322, %v1321, %v680
      %vm1355 = vcmask 293888
      %v1356 = vsel %vm1355, %v1323, %v714
      %v1357 = vsel %vm1355, %v1324, %v716
      %v1358 = vsel %vm1355, %v1325, %v718
      %v1359 = vsel %vm1355, %v1326, %v720
      %v1360 = vsel %vm1355, %v1327, %v722
      %v1361 = vsel %vm1355, %v1328, %v724
      %v1362 = vsel %vm1355, %v1329, %v726
      %v1363 = vsel %vm1355, %v1330, %v728
      %v1364 = vsel %vm1355, %v1331, %v730
      %v1365 = vsel %vm1355, %v1332, %v732
      %v1366 = vsel %vm1355, %v1333, %v734
      %v1367 = vsel %vm1355, %v1334, %v736
      %v1368 = vsel %vm1355, %v1335, %v738
      %v1369 = vsel %vm1355, %v1336, %v740
      %v1370 = vsel %vm1355, %v1337, %v742
      %v1371 = vsel %vm1355, %v1338, %v744
      %v1372 = vsel %vm1355, %v1339, %v746
      %v1373 = vsel %vm1355, %v1340, %v748
      %v1374 = vsel %vm1355, %v1341, %v750
      %v1375 = vsel %vm1355, %v1342, %v752
      %v1376 = vsel %vm1355, %v1343, %v754
      %v1377 = vsel %vm1355, %v1344, %v756
      %v1378 = vsel %vm1355, %v1345, %v758
      %v1379 = vsel %vm1355, %v1346, %v760
      %v1380 = vsel %vm1355, %v1347, %v762
      %v1381 = vsel %vm1355, %v1348, %v764
      %v1382 = vsel %vm1355, %v1349, %v766
      %v1383 = vsel %vm1355, %v1350, %v768
      %v1384 = vsel %vm1355, %v1351, %v770
      %v1385 = vsel %vm1355, %v1352, %v772
      %v1386 = vsel %vm1355, %v1353, %v774
      %v1387 = vsel %vm1355, %v1354, %v776
      %vm1388 = vcmask 392192
      %v1389 = vsel %vm1388, %v1356, %v810
      %v1390 = vsel %vm1388, %v1357, %v812
      %v1391 = vsel %vm1388, %v1358, %v814
      %v1392 = vsel %vm1388, %v1359, %v816
      %v1393 = vsel %vm1388, %v1360, %v818
      %v1394 = vsel %vm1388, %v1361, %v820
      %v1395 = vsel %vm1388, %v1362, %v822
      %v1396 = vsel %vm1388, %v1363, %v824
      %v1397 = vsel %vm1388, %v1364, %v826
      %v1398 = vsel %vm1388, %v1365, %v828
      %v1399 = vsel %vm1388, %v1366, %v830
      %v1400 = vsel %vm1388, %v1367, %v832
      %v1401 = vsel %vm1388, %v1368, %v834
      %v1402 = vsel %vm1388, %v1369, %v836
      %v1403 = vsel %vm1388, %v1370, %v838
      %v1404 = vsel %vm1388, %v1371, %v840
      %v1405 = vsel %vm1388, %v1372, %v842
      %v1406 = vsel %vm1388, %v1373, %v844
      %v1407 = vsel %vm1388, %v1374, %v846
      %v1408 = vsel %vm1388, %v1375, %v848
      %v1409 = vsel %vm1388, %v1376, %v850
      %v1410 = vsel %vm1388, %v1377, %v852
      %v1411 = vsel %vm1388, %v1378, %v854
      %v1412 = vsel %vm1388, %v1379, %v856
      %v1413 = vsel %vm1388, %v1380, %v858
      %v1414 = vsel %vm1388, %v1381, %v860
      %v1415 = vsel %vm1388, %v1382, %v862
      %v1416 = vsel %vm1388, %v1383, %v864
      %v1417 = vsel %vm1388, %v1384, %v866
      %v1418 = vsel %vm1388, %v1385, %v868
      %v1419 = vsel %vm1388, %v1386, %v870
      %v1420 = vsel %vm1388, %v1387, %v872
      %vm1421 = vcmask 490496
      %v1422 = vsel %vm1421, %v1389, %v906
      %v1423 = vsel %vm1421, %v1390, %v908
      %v1424 = vsel %vm1421, %v1391, %v910
      %v1425 = vsel %vm1421, %v1392, %v912
      %v1426 = vsel %vm1421, %v1393, %v914
      %v1427 = vsel %vm1421, %v1394, %v916
      %v1428 = vsel %vm1421, %v1395, %v918
      %v1429 = vsel %vm1421, %v1396, %v920
      %v1430 = vsel %vm1421, %v1397, %v922
      %v1431 = vsel %vm1421, %v1398, %v924
      %v1432 = vsel %vm1421, %v1399, %v926
      %v1433 = vsel %vm1421, %v1400, %v928
      %v1434 = vsel %vm1421, %v1401, %v930
      %v1435 = vsel %vm1421, %v1402, %v932
      %v1436 = vsel %vm1421, %v1403, %v934
      %v1437 = vsel %vm1421, %v1404, %v936
      %v1438 = vsel %vm1421, %v1405, %v938
      %v1439 = vsel %vm1421, %v1406, %v940
      %v1440 = vsel %vm1421, %v1407, %v942
      %v1441 = vsel %vm1421, %v1408, %v944
      %v1442 = vsel %vm1421, %v1409, %v946
      %v1443 = vsel %vm1421, %v1410, %v948
      %v1444 = vsel %vm1421, %v1411, %v950
      %v1445 = vsel %vm1421, %v1412, %v952
      %v1446 = vsel %vm1421, %v1413, %v954
      %v1447 = vsel %vm1421, %v1414, %v956
      %v1448 = vsel %vm1421, %v1415, %v958
      %v1449 = vsel %vm1421, %v1416, %v960
      %v1450 = vsel %vm1421, %v1417, %v962
      %v1451 = vsel %vm1421, %v1418, %v964
      %v1452 = vsel %vm1421, %v1419, %v966
      %v1453 = vsel %vm1421, %v1420, %v968
      %vm1454 = vcmask 588800
      %v1455 = vsel %vm1454, %v1422, %v1002
      %v1456 = vsel %vm1454, %v1423, %v1004
      %v1457 = vsel %vm1454, %v1424, %v1006
      %v1458 = vsel %vm1454, %v1425, %v1008
      %v1459 = vsel %vm1454, %v1426, %v1010
      %v1460 = vsel %vm1454, %v1427, %v1012
      %v1461 = vsel %vm1454, %v1428, %v1014
      %v1462 = vsel %vm1454, %v1429, %v1016
      %v1463 = vsel %vm1454, %v1430, %v1018
      %v1464 = vsel %vm1454, %v1431, %v1020
      %v1465 = vsel %vm1454, %v1432, %v1022
      %v1466 = vsel %vm1454, %v1433, %v1024
      %v1467 = vsel %vm1454, %v1434, %v1026
      %v1468 = vsel %vm1454, %v1435, %v1028
      %v1469 = vsel %vm1454, %v1436, %v1030
      %v1470 = vsel %vm1454, %v1437, %v1032
      %v1471 = vsel %vm1454, %v1438, %v1034
      %v1472 = vsel %vm1454, %v1439, %v1036
      %v1473 = vsel %vm1454, %v1440, %v1038
      %v1474 = vsel %vm1454, %v1441, %v1040
      %v1475 = vsel %vm1454, %v1442, %v1042
      %v1476 = vsel %vm1454, %v1443, %v1044
      %v1477 = vsel %vm1454, %v1444, %v1046
      %v1478 = vsel %vm1454, %v1445, %v1048
      %v1479 = vsel %vm1454, %v1446, %v1050
      %v1480 = vsel %vm1454, %v1447, %v1052
      %v1481 = vsel %vm1454, %v1448, %v1054
      %v1482 = vsel %vm1454, %v1449, %v1056
      %v1483 = vsel %vm1454, %v1450, %v1058
      %v1484 = vsel %vm1454, %v1451, %v1060
      %v1485 = vsel %vm1454, %v1452, %v1062
      %v1486 = vsel %vm1454, %v1453, %v1064
      %vm1487 = vcmask 687104
      %v1488 = vsel %vm1487, %v1455, %v1098
      %v1489 = vsel %vm1487, %v1456, %v1100
      %v1490 = vsel %vm1487, %v1457, %v1102
      %v1491 = vsel %vm1487, %v1458, %v1104
      %v1492 = vsel %vm1487, %v1459, %v1106
      %v1493 = vsel %vm1487, %v1460, %v1108
      %v1494 = vsel %vm1487, %v1461, %v1110
      %v1495 = vsel %vm1487, %v1462, %v1112
      %v1496 = vsel %vm1487, %v1463, %v1114
      %v1497 = vsel %vm1487, %v1464, %v1116
      %v1498 = vsel %vm1487, %v1465, %v1118
      %v1499 = vsel %vm1487, %v1466, %v1120
      %v1500 = vsel %vm1487, %v1467, %v1122
      %v1501 = vsel %vm1487, %v1468, %v1124
      %v1502 = vsel %vm1487, %v1469, %v1126
      %v1503 = vsel %vm1487, %v1470, %v1128
      %v1504 = vsel %vm1487, %v1471, %v1130
      %v1505 = vsel %vm1487, %v1472, %v1132
      %v1506 = vsel %vm1487, %v1473, %v1134
      %v1507 = vsel %vm1487, %v1474, %v1136
      %v1508 = vsel %vm1487, %v1475, %v1138
      %v1509 = vsel %vm1487, %v1476, %v1140
      %v1510 = vsel %vm1487, %v1477, %v1142
      %v1511 = vsel %vm1487, %v1478, %v1144
      %v1512 = vsel %vm1487, %v1479, %v1146
      %v1513 = vsel %vm1487, %v1480, %v1148
      %v1514 = vsel %vm1487, %v1481, %v1150
      %v1515 = vsel %vm1487, %v1482, %v1152
      %v1516 = vsel %vm1487, %v1483, %v1154
      %v1517 = vsel %vm1487, %v1484, %v1156
      %v1518 = vsel %vm1487, %v1485, %v1158
      %v1519 = vsel %vm1487, %v1486, %v1160
      %vm1520 = vcmask 785408
      %v1521 = vsel %vm1520, %v1488, %v1194
      %v1522 = vsel %vm1520, %v1489, %v1196
      %v1523 = vsel %vm1520, %v1490, %v1198
      %v1524 = vsel %vm1520, %v1491, %v1200
      %v1525 = vsel %vm1520, %v1492, %v1202
      %v1526 = vsel %vm1520, %v1493, %v1204
      %v1527 = vsel %vm1520, %v1494, %v1206
      %v1528 = vsel %vm1520, %v1495, %v1208
      %v1529 = vsel %vm1520, %v1496, %v1210
      %v1530 = vsel %vm1520, %v1497, %v1212
      %v1531 = vsel %vm1520, %v1498, %v1214
      %v1532 = vsel %vm1520, %v1499, %v1216
      %v1533 = vsel %vm1520, %v1500, %v1218
      %v1534 = vsel %vm1520, %v1501, %v1220
      %v1535 = vsel %vm1520, %v1502, %v1222
      %v1536 = vsel %vm1520, %v1503, %v1224
      %v1537 = vsel %vm1520, %v1504, %v1226
      %v1538 = vsel %vm1520, %v1505, %v1228
      %v1539 = vsel %vm1520, %v1506, %v1230
      %v1540 = vsel %vm1520, %v1507, %v1232
      %v1541 = vsel %vm1520, %v1508, %v1234
      %v1542 = vsel %vm1520, %v1509, %v1236
      %v1543 = vsel %vm1520, %v1510, %v1238
      %v1544 = vsel %vm1520, %v1511, %v1240
      %v1545 = vsel %vm1520, %v1512, %v1242
      %v1546 = vsel %vm1520, %v1513, %v1244
      %v1547 = vsel %vm1520, %v1514, %v1246
      %v1548 = vsel %vm1520, %v1515, %v1248
      %v1549 = vsel %vm1520, %v1516, %v1250
      %v1550 = vsel %vm1520, %v1517, %v1252
      %v1551 = vsel %vm1520, %v1518, %v1254
      %v1552 = vsel %vm1520, %v1519, %v1256
      %vm1553 = vcmask 883712
      %v1554 = vsel %vm1553, %v1521, 1.0
      %v1555 = vsel %vm1553, %v1522, 1.0
      %v1556 = vsel %vm1553, %v1523, 1.0
      %v1557 = vsel %vm1553, %v1524, 1.0
      %v1558 = vsel %vm1553, %v1525, 1.0
      %v1559 = vsel %vm1553, %v1526, 1.0
      %v1560 = vsel %vm1553, %v1527, 1.0
      %v1561 = vsel %vm1553, %v1528, 1.0
      %v1562 = vsel %vm1553, %v1529, 1.0
      %v1563 = vsel %vm1553, %v1530, 1.0
      %v1564 = vsel %vm1553, %v1531, 1.0
      %v1565 = vsel %vm1553, %v1532, 1.0
      %v1566 = vsel %vm1553, %v1533, 1.0
      %v1567 = vsel %vm1553, %v1534, 1.0
      %v1568 = vsel %vm1553, %v1535, 1.0
      %v1569 = vsel %vm1553, %v1536, 1.0
      %v1570 = vsel %vm1553, %v1537, 1.0
      %v1571 = vsel %vm1553, %v1538, 1.0
      %v1572 = vsel %vm1553, %v1539, 1.0
      %v1573 = vsel %vm1553, %v1540, 1.0
      %v1574 = vsel %vm1553, %v1541, 1.0
      %v1575 = vsel %vm1553, %v1542, 1.0
      %v1576 = vsel %vm1553, %v1543, 1.0
      %v1577 = vsel %vm1553, %v1544, 1.0
      %v1578 = vsel %vm1553, %v1545, 1.0
      %v1579 = vsel %vm1553, %v1546, 1.0
      %v1580 = vsel %vm1553, %v1547, 1.0
      %v1581 = vsel %vm1553, %v1548, 1.0
      %v1582 = vsel %vm1553, %v1549, 1.0
      %v1583 = vsel %vm1553, %v1550, 1.0
      %v1584 = vsel %vm1553, %v1551, 1.0
      %v1585 = vsel %vm1553, %v1552, 1.0
      %v1586 = vld [vmem:[%s1] sm:$0xff]
      %v1587 = vld [vmem:[%s1 + $0x8] sm:$0xff]
      %v1588 = vld [vmem:[%s1 + $0x10] sm:$0xff]
      %v1589 = vld [vmem:[%s1 + $0x18] sm:$0xff]
      %1590 = vmatprep.subr.mxu0 0.0
      %1591 = vmatpush1.xpose.msra.mxu0 %v1554
      %1592 = vmatprep.subr.mxu0 0.0
      %1593 = vmatpush1.xpose.msra.mxu0 %v1555
      %1594 = vmatprep.subr.mxu0 0.0
      %1595 = vmatpush1.xpose.msra.mxu0 %v1556
      %1596 = vmatprep.subr.mxu0 0.0
      %1597 = vmatpush1.xpose.msra.mxu0 %v1557
      %1598 = vmatprep.subr.mxu0 0.0
      %1599 = vmatpush1.xpose.msra.mxu0 %v1558
      %1600 = vmatprep.subr.mxu0 0.0
      %1601 = vmatpush1.xpose.msra.mxu0 %v1559
      %1602 = vmatprep.subr.mxu0 0.0
      %1603 = vmatpush1.xpose.msra.mxu0 %v1560
      %1604 = vmatprep.subr.mxu0 0.0
      %1605 = vmatpush1.xpose.msra.mxu0 %v1561
      %1606 = vmatprep.subr.mxu0 0.0
      %1607 = vmatpush1.xpose.msra.mxu0 %v1562
      %1608 = vmatprep.subr.mxu0 0.0
      %1609 = vmatpush1.xpose.msra.mxu0 %v1563
      %1610 = vmatprep.subr.mxu0 0.0
      %1611 = vmatpush1.xpose.msra.mxu0 %v1564
      %1612 = vmatprep.subr.mxu0 0.0
      %1613 = vmatpush1.xpose.msra.mxu0 %v1565
      %1614 = vmatprep.subr.mxu0 0.0
      %1615 = vmatpush1.xpose.msra.mxu0 %v1566
      %1616 = vmatprep.subr.mxu0 0.0
      %1617 = vmatpush1.xpose.msra.mxu0 %v1567
      %1618 = vmatprep.subr.mxu0 0.0
      %1619 = vmatpush1.xpose.msra.mxu0 %v1568
      %1620 = vmatprep.subr.mxu0 0.0
      %1621 = vmatpush1.xpose.msra.mxu0 %v1569
      %1622 = vmatprep.subr.mxu0 0.0
      %1623 = vmatpush1.xpose.msra.mxu0 %v1570
      %1624 = vmatprep.subr.mxu0 0.0
      %1625 = vmatpush1.xpose.msra.mxu0 %v1571
      %1626 = vmatprep.subr.mxu0 0.0
      %1627 = vmatpush1.xpose.msra.mxu0 %v1572
      %1628 = vmatprep.subr.mxu0 0.0
      %1629 = vmatpush1.xpose.msra.mxu0 %v1573
      %1630 = vmatprep.subr.mxu0 0.0
      %1631 = vmatpush1.xpose.msra.mxu0 %v1574
      %1632 = vmatprep.subr.mxu0 0.0
      %1633 = vmatpush1.xpose.msra.mxu0 %v1575
      %1634 = vmatprep.subr.mxu0 0.0
      %1635 = vmatpush1.xpose.msra.mxu0 %v1576
      %1636 = vmatprep.subr.mxu0 0.0
      %1637 = vmatpush1.xpose.msra.mxu0 %v1577
      %1638 = vmatprep.subr.mxu0 0.0
      %1639 = vmatpush1.xpose.msra.mxu0 %v1578
      %1640 = vmatprep.subr.mxu0 0.0
      %1641 = vmatpush1.xpose.msra.mxu0 %v1579
      %1642 = vmatprep.subr.mxu0 0.0
      %1643 = vmatpush1.xpose.msra.mxu0 %v1580
      %1644 = vmatprep.subr.mxu0 0.0
      %1645 = vmatpush1.xpose.msra.mxu0 %v1581
      %1646 = vmatprep.subr.mxu0 0.0
      %1647 = vmatpush1.xpose.msra.mxu0 %v1582
      %1648 = vmatprep.subr.mxu0 0.0
      %1649 = vmatpush1.xpose.msra.mxu0 %v1583
      %1650 = vmatprep.subr.mxu0 0.0
      %1651 = vmatpush1.xpose.msra.mxu0 %v1584
      %1652 = vmatprep.subr.mxu0 0.0
      %1653 = vmatpush1.xpose.msra.mxu0 %v1585
      %1654 = vmatprep.mubr.f32.mxu0 0.0
      %1655 = vmatmul.mubr.f32.gmra.mrb[0].mxu0 %v1586
      %v1656 = vpop.f32.mrb[0].mxu0
      %v1657 = vadd.f32 0.0, %v1656
      %v1658 = vpop.f32.mrb[0].mxu0
      %v1659 = vadd.f32 0.0, %v1658
      %1660 = vmatprep.mubr.f32.mxu0 0.0
      %1661 = vmatmul.mubr.f32.gmra.mrb[0].mxu0 %v1587
      %v1662 = vpop.f32.mrb[0].mxu0
      %v1663 = vadd.f32 0.0, %v1662
      %v1664 = vpop.f32.mrb[0].mxu0
      %v1665 = vadd.f32 0.0, %v1664
      %1666 = vmatprep.mubr.f32.mxu0 0.0
      %1667 = vmatmul.mubr.f32.gmra.mrb[0].mxu0 %v1588
      %v1668 = vpop.f32.mrb[0].mxu0
      %v1669 = vadd.f32 0.0, %v1668
      %v1670 = vpop.f32.mrb[0].mxu0
      %v1671 = vadd.f32 0.0, %v1670
      %1672 = vmatprep.mubr.f32.mxu0 0.0
      %1673 = vmatmul.mubr.f32.gmra.mrb[0].mxu0 %v1589
      %v1674 = vpop.f32.mrb[0].mxu0
      %v1675 = vadd.f32 0.0, %v1674
      %v1676 = vpop.f32.mrb[0].mxu0
      %v1677 = vadd.f32 0.0, %v1676
      %1678 = vdwg.mxu0
      %v1679 = vxor.u32 %v1657, 2147483648
      %v1680 = vxor.u32 %v1659, 2147483648
      %v1681 = vxor.u32 %v1663, 2147483648
      %v1682 = vxor.u32 %v1665, 2147483648
      %v1683 = vxor.u32 %v1669, 2147483648
      %v1684 = vxor.u32 %v1671, 2147483648
      %v1685 = vmul.f32 %v1679, 1.442695
      %v1686 = vpow.pop %v1685
      %v1687 = vmul.f32 %v1680, 1.442695
      %v1688 = vpow.pop %v1687
      %v1689 = vmul.f32 %v1681, 1.442695
      %v1690 = vpow.pop %v1689
      %v1691 = vmul.f32 %v1682, 1.442695
      %v1692 = vpow.pop %v1691
      %v1693 = vmul.f32 %v1683, 1.442695
      %v1694 = vpow.pop %v1693
      %v1695 = vmul.f32 %v1684, 1.442695
      %v1696 = vpow.pop %v1695
      %v1697 = vadd.f32 %v1686, 1.0
      %v1698 = vadd.f32 %v1688, 1.0
      %v1699 = vadd.f32 %v1690, 1.0
      %v1700 = vadd.f32 %v1692, 1.0
      %v1701 = vadd.f32 %v1694, 1.0
      %v1702 = vadd.f32 %v1696, 1.0
      %v1703 = vrcp.pop %v1697
      %v1704 = vmul.f32 1.0, %v1703
      %v1705 = vrcp.pop %v1698
      %v1706 = vmul.f32 1.0, %v1705
      %v1707 = vrcp.pop %v1699
      %v1708 = vmul.f32 1.0, %v1707
      %v1709 = vrcp.pop %v1700
      %v1710 = vmul.f32 1.0, %v1709
      %v1711 = vrcp.pop %v1701
      %v1712 = vmul.f32 1.0, %v1711
      %v1713 = vrcp.pop %v1702
      %v1714 = vmul.f32 1.0, %v1713
      %v1715 = vtanh.pop %v1675
      %v1716 = vtanh.pop %v1677
      %v1717 = vld [vmem:[%s220] sm:$0xff]
      %v1718 = vld [vmem:[%s220 + $0x8] sm:$0xff]
      %v1719 = vmul.f32 %v1708, %v1717
      %v1720 = vmul.f32 %v1710, %v1718
      %v1721 = vmul.f32 %v1704, %v1715
      %v1722 = vmul.f32 %v1706, %v1716
      %v1723 = vadd.f32 %v1719, %v1721
      %v1724 = vadd.f32 %v1720, %v1722
      %v1725 = vtanh.pop %v1723
      %v1726 = vtanh.pop %v1724
      %v1727 = vmul.f32 %v1712, %v1725
      %v1728 = vmul.f32 %v1714, %v1726
      %1729 = vst [vmem:[%s230] sm:$0xff] %v1723
      %1730 = vst [vmem:[%s230 + $0x8] sm:$0xff] %v1724
      %1731 = vst [vmem:[%s225] sm:$0xff] %v1727
      %1732 = vst [vmem:[%s225 + $0x8] sm:$0xff] %v1728
      %p1733 = scmp.lt.s32.totalorder %s16, 1
      %s1734 = scalar_select %p1733, %s16, 1
      %s1735 = smul.addr %s1734, 2
      %s1736 = smul.addr %s1735, 8
      %s1737 = scalar_lea.vmem %s3, %s1736
      %p1738 = scmp.lt.s32.totalorder %s16, 1
      %s1739 = scalar_select %p1738, %s16, 1
      %s1740 = smul.addr %s1739, 2
      %s1741 = smul.addr %s1740, 8
      %s1742 = scalar_lea.vmem %s4, %s1741
      // Predicated region
      $region33: #{conv_lstm_cell.1} parent=31 // pred_check
        %p1743 = pneg %p107
      $region34: #{conv_lstm_cell.1} parent=31 // pred_check_branch
        %1745 = sbr.rel (%p1743) target = $region36
      $region35: #{conv_lstm_cell.1} parent=31 // pred_region
        _
      $region36: #{conv_lstm_cell.1} parent=31 // pred_fallthru
        _
      // Predicated region
      $region37: #{conv_lstm_cell.1} parent=31 // pred_check
        %p1746 = pneg %p133
      $region38: #{conv_lstm_cell.1} parent=31 // pred_check_branch
        %1748 = sbr.rel (%p1746) target = $region40
      $region39: #{conv_lstm_cell.1} parent=31 // pred_region
        _
      $region40: #{conv_lstm_cell.1} parent=31 // pred_fallthru
        _
    $region32: #{conv_lstm_cell.1} parent=5 // pred_fallthru
      _
    %p1749 = scmp.le.s32.totalorder 2, %s11
    // Predicated region
    $region41: #{conv_lstm_cell.1} parent=5 // pred_check
      %p1750 = pneg %p1749
    $region42: #{conv_lstm_cell.1} parent=5 // pred_check_branch
      %1752 = sbr.rel (%p1750) target = $region44
    $region43: #{conv_lstm_cell.1} parent=5 // pred_region
      %s1753 = ssub.s32 %s11, 2
      // Predicated region
      $region45: #{conv_lstm_cell.1} parent=43 // pred_check
        %p1754 = pneg %p113
      $region46: #{conv_lstm_cell.1} parent=43 // pred_check_branch
        %1756 = sbr.rel (%p1754) target = $region48
      $region47: #{conv_lstm_cell.1} parent=43 // pred_region
        %p1757 = scmp.lt.s32.totalorder %s17, 1
        %s1758 = scalar_select %p1757, %s17, 1
        %s1759 = smul.addr %s1758, 2
        %s1760 = smul.addr %s1759, 8
        %s1761 = scalar_lea.vmem %s3, %s1760
      $region48: #{conv_lstm_cell.1} parent=43 // pred_fallthru
        _
      // Predicated region
      $region49: #{conv_lstm_cell.1} parent=43 // pred_check
        %p1762 = pneg %p139
      $region50: #{conv_lstm_cell.1} parent=43 // pred_check_branch
        %1764 = sbr.rel (%p1762) target = $region52
      $region51: #{conv_lstm_cell.1} parent=43 // pred_region
        %p1765 = scmp.lt.s32.totalorder %s17, 1
        %s1766 = scalar_select %p1765, %s17, 1
        %s1767 = smul.addr %s1766, 2
        %s1768 = smul.addr %s1767, 8
        %s1769 = scalar_lea.vmem %s4, %s1768
      $region52: #{conv_lstm_cell.1} parent=43 // pred_fallthru
        _
    $region44: #{conv_lstm_cell.1} parent=5 // pred_fallthru
      _
  $region6: #{conv_lstm_cell.1} parent=0 // loop_footer
    %s15 = sadd.s32 1, %s11
  $region7: #{conv_lstm_cell.1} parent=0 // loop_footer_branch
    %10 = sbr.rel target = $region3
  $region8: #{conv_lstm_cell.1} parent=0 // loop_exit
    _

</llo_original>
